<compile_context>
chip_gen: v5e
topology: v5e:2x2
jax: 0.10.0
libtpu: 0.0.40
codegen_flags: <defaults>
</compile_context>

<pallas_src>
import functools

import jax
import jax.numpy as jnp
from jax.experimental import pallas as pl
from jax.experimental.pallas import tpu as pltpu


def _round_up(n, m):
    return ((n + m - 1) // m) * m


def _mlp_kernel(x_ref, w1_ref, b1_ref, w2_ref, b2_ref, w3_ref, b3_ref, o_ref):
    # Layer 1: Linear + ReLU  (bf16 x bf16 -> f32 accumulation on the MXU)
    h1 = jnp.dot(x_ref[...], w1_ref[...], preferred_element_type=jnp.float32)
    h1 = jnp.maximum(h1 + b1_ref[...], 0.0)          # f32 bias-add / ReLU (VPU)
    # Layer 2: Linear + ReLU
    h2 = jnp.dot(h1.astype(w2_ref.dtype), w2_ref[...],
                 preferred_element_type=jnp.float32)
    h2 = jnp.maximum(h2 + b2_ref[...], 0.0)
    # Layer 3: Linear (no activation), lane-dense (128-padded) output
    o = jnp.dot(h2.astype(w3_ref.dtype), w3_ref[...],
                preferred_element_type=jnp.float32)
    o_ref[...] = (o + b3_ref[...]).astype(o_ref.dtype)


@functools.partial(jax.jit, static_argnames=("tile_b",))
def dqn_forward(x, params, *, tile_b=256):
    """x: [B, input_size] f32.  params: dict of w1,b1,w2,b2,w3,b3 (f32, [in,out] / [1,out])."""
    B, in_size = x.shape
    h1_size = params["w1"].shape[1]
    h2_size = params["w2"].shape[1]
    out_size = params["w3"].shape[1]
    out_pad = _round_up(out_size, 128)                 # lane-dense output

    # bf16 storage for x and weights (f32 accumulation in-kernel); biases stay f32.
    w1 = params["w1"].astype(jnp.bfloat16)
    w2 = params["w2"].astype(jnp.bfloat16)
    w3 = jnp.pad(params["w3"], ((0, 0), (0, out_pad - out_size))).astype(jnp.bfloat16)
    b1 = params["b1"].astype(jnp.float32)
    b2 = params["b2"].astype(jnp.float32)
    b3 = jnp.pad(params["b3"], ((0, 0), (0, out_pad - out_size))).astype(jnp.float32)

    # Batch tiling: weights stay resident across tiles; x/out tiles are pipelined.
    tb = min(tile_b, _round_up(B, 8))
    b_pad = _round_up(B, tb)
    xp = jnp.pad(x, ((0, b_pad - B), (0, 0))).astype(jnp.bfloat16)
    grid = (b_pad // tb,)

    resident = lambda a: pl.BlockSpec(a.shape, lambda i: (0,) * a.ndim)

    flops = 2 * b_pad * (in_size * h1_size + h1_size * h2_size + h2_size * out_pad)
    bytes_accessed = (xp.size * 2 + w1.size * 2 + w2.size * 2 + w3.size * 2
                      + b1.size * 4 + b2.size * 4 + b3.size * 4
                      + b_pad * out_pad * 4)

    out = pl.pallas_call(
        _mlp_kernel,
        out_shape=jax.ShapeDtypeStruct((b_pad, out_pad), jnp.float32),
        grid=grid,
        in_specs=[
            pl.BlockSpec((tb, in_size), lambda i: (i, 0)),   # x: tiled on batch
            resident(w1), resident(b1),
            resident(w2), resident(b2),
            resident(w3), resident(b3),
        ],
        out_specs=pl.BlockSpec((tb, out_pad), lambda i: (i, 0)),
        compiler_params=pltpu.CompilerParams(
            dimension_semantics=("parallel",),               # v7x: split tiles across TCs
            vmem_limit_bytes=32 * 1024 * 1024,               # safe on v7x's 64 MiB VMEM
        ),
        cost_estimate=pl.CostEstimate(
            flops=flops, transcendentals=0, bytes_accessed=bytes_accessed),
    )(xp, w1, b1, w2, b2, w3, b3)

    return out[:B, :out_size]
    # TODO(synk): for per-env-step tiny-batch serving, keep weights VMEM-resident across
    # calls (cross-call prefetch / semaphore futures) instead of re-DMAing them each call.


def init_dqn_params(key, input_size, output_size):
    """Deterministic init matching PyTorch nn.Linear default (U[-1/sqrt(fan_in), +])."""
    def linear(key, fan_in, fan_out):
        kw, kb = jax.random.split(key)
        bound = 1.0 / jnp.sqrt(jnp.float32(fan_in))
        w = jax.random.uniform(kw, (fan_in, fan_out), jnp.float32, -bound, bound)
        b = jax.random.uniform(kb, (1, fan_out), jnp.float32, -bound, bound)
        return w, b

    k1, k2, k3 = jax.random.split(key, 3)
    w1, b1 = linear(k1, input_size, 1024)
    w2, b2 = linear(k2, 1024, 512)
    w3, b3 = linear(k3, 512, output_size)
    return {"w1": w1, "b1": b1, "w2": w2, "b2": b2, "w3": w3, "b3": b3}


if __name__ == "__main__":
    key = jax.random.PRNGKey(0)
    k_params, k_x = jax.random.split(key)

    batch = 8
    input_size = 32
    output_size = 8

    params = init_dqn_params(k_params, input_size, output_size)
    x = jax.random.normal(k_x, (batch, input_size), jnp.float32)

    out = dqn_forward(x, params)
    out = jax.block_until_ready(out)

    # Pure-JAX reference with the same bf16-weight / f32-accumulate numerics.
    xb = x.astype(jnp.bfloat16)
    w1b = params["w1"].astype(jnp.bfloat16)
    w2b = params["w2"].astype(jnp.bfloat16)
    w3b = params["w3"].astype(jnp.bfloat16)
    h = jnp.maximum(jnp.dot(xb, w1b, preferred_element_type=jnp.float32) + params["b1"], 0.0)
    h = jnp.maximum(jnp.dot(h.astype(jnp.bfloat16), w2b,
                            preferred_element_type=jnp.float32) + params["b2"], 0.0)
    ref = jnp.dot(h.astype(jnp.bfloat16), w3b,
                  preferred_element_type=jnp.float32) + params["b3"]

    assert out.shape == (batch, output_size)
    assert jnp.allclose(out, ref, atol=1e-2, rtol=1e-2)

    print("KERNEL_OK")
</pallas_src>

<mosaic_0001>
module attributes {stable_mosaic.version = 11 : i64} {
  func.func @_mlp_kernel(%arg0: i32, %arg1: memref<8x32xbf16, #tpu.memory_space<vmem>>, %arg2: memref<32x1024xbf16, #tpu.memory_space<vmem>>, %arg3: memref<1x1024xf32, #tpu.memory_space<vmem>>, %arg4: memref<1024x512xbf16, #tpu.memory_space<vmem>>, %arg5: memref<1x512xf32, #tpu.memory_space<vmem>>, %arg6: memref<512x128xbf16, #tpu.memory_space<vmem>>, %arg7: memref<1x128xf32, #tpu.memory_space<vmem>>, %arg8: memref<8x128xf32, #tpu.memory_space<vmem>>) attributes {dimension_semantics = [#tpu.dimension_semantics<parallel>], iteration_bounds = array<i64: 1>, scalar_prefetch = 0 : i64, scratch_operands = 0 : i64, tpu.core_type = #tpu.core_type<tc>, window_params = [{transform_indices = @transform_0, window_bounds = array<i64: 8, 32>}, {pipeline_mode = #tpu.pipeline_mode<synchronous>, transform_indices = @transform_1, window_bounds = array<i64: 32, 1024>}, {pipeline_mode = #tpu.pipeline_mode<synchronous>, transform_indices = @transform_2, window_bounds = array<i64: 1, 1024>}, {pipeline_mode = #tpu.pipeline_mode<synchronous>, transform_indices = @transform_3, window_bounds = array<i64: 1024, 512>}, {pipeline_mode = #tpu.pipeline_mode<synchronous>, transform_indices = @transform_4, window_bounds = array<i64: 1, 512>}, {pipeline_mode = #tpu.pipeline_mode<synchronous>, transform_indices = @transform_5, window_bounds = array<i64: 512, 128>}, {pipeline_mode = #tpu.pipeline_mode<synchronous>, transform_indices = @transform_6, window_bounds = array<i64: 1, 128>}, {transform_indices = @transform_7, window_bounds = array<i64: 8, 128>}]} {
    %c0 = arith.constant 0 : index
    %c0_0 = arith.constant 0 : index
    %0 = vector.load %arg1[%c0, %c0_0] : memref<8x32xbf16, #tpu.memory_space<vmem>>, vector<8x32xbf16>
    %c0_1 = arith.constant 0 : index
    %c0_2 = arith.constant 0 : index
    %1 = vector.load %arg2[%c0_1, %c0_2] : memref<32x1024xbf16, #tpu.memory_space<vmem>>, vector<32x1024xbf16>
    %cst = arith.constant dense<0.000000e+00> : vector<8x1024xf32>
    %2 = tpu.matmul %0, %1, %cst {dimension_numbers = #tpu.dot_dimension_numbers<[1], [0], [0], [1], [0, 0, 1, 1], [], []>} : vector<8x32xbf16>, vector<32x1024xbf16>, vector<8x1024xf32> -> vector<8x1024xf32>
    %c0_3 = arith.constant 0 : index
    %c0_4 = arith.constant 0 : index
    %3 = vector.load %arg3[%c0_3, %c0_4] : memref<1x1024xf32, #tpu.memory_space<vmem>>, vector<1x1024xf32>
    %4 = vector.broadcast %3 : vector<1x1024xf32> to vector<8x1024xf32>
    %5 = arith.addf %2, %4 : vector<8x1024xf32>
    %cst_5 = arith.constant 0.000000e+00 : f32
    %6 = vector.broadcast %cst_5 : f32 to vector<8x1024xf32>
    %7 = arith.maximumf %5, %6 : vector<8x1024xf32>
    %8 = arith.truncf %7 : vector<8x1024xf32> to vector<8x1024xbf16>
    %c0_6 = arith.constant 0 : index
    %c0_7 = arith.constant 0 : index
    %9 = vector.load %arg4[%c0_6, %c0_7] : memref<1024x512xbf16, #tpu.memory_space<vmem>>, vector<1024x512xbf16>
    %cst_8 = arith.constant dense<0.000000e+00> : vector<8x512xf32>
    %10 = tpu.matmul %8, %9, %cst_8 {dimension_numbers = #tpu.dot_dimension_numbers<[1], [0], [0], [1], [0, 0, 1, 1], [], []>} : vector<8x1024xbf16>, vector<1024x512xbf16>, vector<8x512xf32> -> vector<8x512xf32>
    %c0_9 = arith.constant 0 : index
    %c0_10 = arith.constant 0 : index
    %11 = vector.load %arg5[%c0_9, %c0_10] : memref<1x512xf32, #tpu.memory_space<vmem>>, vector<1x512xf32>
    %12 = vector.broadcast %11 : vector<1x512xf32> to vector<8x512xf32>
    %13 = arith.addf %10, %12 : vector<8x512xf32>
    %cst_11 = arith.constant 0.000000e+00 : f32
    %14 = vector.broadcast %cst_11 : f32 to vector<8x512xf32>
    %15 = arith.maximumf %13, %14 : vector<8x512xf32>
    %16 = arith.truncf %15 : vector<8x512xf32> to vector<8x512xbf16>
    %c0_12 = arith.constant 0 : index
    %c0_13 = arith.constant 0 : index
    %17 = vector.load %arg6[%c0_12, %c0_13] : memref<512x128xbf16, #tpu.memory_space<vmem>>, vector<512x128xbf16>
    %cst_14 = arith.constant dense<0.000000e+00> : vector<8x128xf32>
    %18 = tpu.matmul %16, %17, %cst_14 {dimension_numbers = #tpu.dot_dimension_numbers<[1], [0], [0], [1], [0, 0, 1, 1], [], []>} : vector<8x512xbf16>, vector<512x128xbf16>, vector<8x128xf32> -> vector<8x128xf32>
    %c0_15 = arith.constant 0 : index
    %c0_16 = arith.constant 0 : index
    %19 = vector.load %arg7[%c0_15, %c0_16] : memref<1x128xf32, #tpu.memory_space<vmem>>, vector<1x128xf32>
    %20 = vector.broadcast %19 : vector<1x128xf32> to vector<8x128xf32>
    %21 = arith.addf %18, %20 : vector<8x128xf32>
    %c0_17 = arith.constant 0 : index
    %c0_18 = arith.constant 0 : index
    %22 = vector.load %arg8[%c0_17, %c0_18] : memref<8x128xf32, #tpu.memory_space<vmem>>, vector<8x128xf32>
    tpu.vector_store %arg8[%c0_17, %c0_18], %21 {strides = array<i32>} : memref<8x128xf32, #tpu.memory_space<vmem>>, vector<8x128xf32>,
    return
  }
  func.func @transform_0(%arg0: i32) -> (i32, i32) {
    %c0_i32 = arith.constant 0 : i32
    %c0_i32_0 = arith.constant 0 : i32
    return %arg0, %c0_i32 : i32, i32
  }
  func.func @transform_1(%arg0: i32) -> (i32, i32) {
    %c0_i32 = arith.constant 0 : i32
    %c0_i32_0 = arith.constant 0 : i32
    %c0_i32_1 = arith.constant 0 : i32
    return %c0_i32, %c0_i32_0 : i32, i32
  }
  func.func @transform_2(%arg0: i32) -> (i32, i32) {
    %c0_i32 = arith.constant 0 : i32
    %c0_i32_0 = arith.constant 0 : i32
    %c0_i32_1 = arith.constant 0 : i32
    return %c0_i32, %c0_i32_0 : i32, i32
  }
  func.func @transform_3(%arg0: i32) -> (i32, i32) {
    %c0_i32 = arith.constant 0 : i32
    %c0_i32_0 = arith.constant 0 : i32
    %c0_i32_1 = arith.constant 0 : i32
    return %c0_i32, %c0_i32_0 : i32, i32
  }
  func.func @transform_4(%arg0: i32) -> (i32, i32) {
    %c0_i32 = arith.constant 0 : i32
    %c0_i32_0 = arith.constant 0 : i32
    %c0_i32_1 = arith.constant 0 : i32
    return %c0_i32, %c0_i32_0 : i32, i32
  }
  func.func @transform_5(%arg0: i32) -> (i32, i32) {
    %c0_i32 = arith.constant 0 : i32
    %c0_i32_0 = arith.constant 0 : i32
    %c0_i32_1 = arith.constant 0 : i32
    return %c0_i32, %c0_i32_0 : i32, i32
  }
  func.func @transform_6(%arg0: i32) -> (i32, i32) {
    %c0_i32 = arith.constant 0 : i32
    %c0_i32_0 = arith.constant 0 : i32
    %c0_i32_1 = arith.constant 0 : i32
    return %c0_i32, %c0_i32_0 : i32, i32
  }
  func.func @transform_7(%arg0: i32) -> (i32, i32) {
    %c0_i32 = arith.constant 0 : i32
    %c0_i32_0 = arith.constant 0 : i32
    return %arg0, %c0_i32 : i32, i32
  }
}

</mosaic_0001>

<llo_original>
// kernel: dqn_forward.1
$region0: #{dqn_forward.1}
  #allocation0 [shape = 'u32[]', space=smem, size = 0x4, offset = 0x4, fixed_abs, tag = 'smem constant byte address 0x4 - core index']
  #allocation1 [shape = 'u32[72,128]{1,0:T(1,128)}', space=vmem, size = 0x9000, scoped, tag = 'internal scratch']
  %s0 = inlined_call_operand.vmem [shape: bf16[8,32], index: 0, kind: input, shape index: {}]
  %s1 = inlined_call_operand.vmem [shape: bf16[32,1024], index: 1, kind: input, shape index: {}]
  %s2 = inlined_call_operand.vmem [shape: f32[1,1024], index: 2, kind: input, shape index: {}]
  %s3 = inlined_call_operand.vmem [shape: bf16[1024,512], index: 3, kind: input, shape index: {}]
  %s4 = inlined_call_operand.vmem [shape: f32[1,512], index: 4, kind: input, shape index: {}]
  %s5 = inlined_call_operand.vmem [shape: bf16[512,128], index: 5, kind: input, shape index: {}]
  %s6 = inlined_call_operand.vmem [shape: f32[1,128], index: 6, kind: input, shape index: {}]
  %s7 = inlined_call_operand.hbm [shape: f32[8,128], index: 7, kind: output, shape index: {}]
  %s8 = sld [smem:[#allocation0]]
  $region38: #{dqn_forward.1} parent=0
    _
  %s10 = ssub.s32 1, %s8
  %s11 = scalar_select 0, %s10, %s8
  $region1: #{dqn_forward.1} parent=0
    #allocation2 [shape = 'u8[4096]{0}', space=vmem, size = 0x1000, scoped, tag = 'output window, operand 0, single buffered']
    #allocation3 [shape = 's32[1]{0}', space=sflag, size = 0x4, scoped, tag = 'scoped memory for dqn_forward.1']
    %12 = vsyncpa [#allocation3], 0
    // Predicated region
    $region2: #{dqn_forward.1} parent=1 // pred_check
      _
    $region3: #{dqn_forward.1} parent=1 // pred_check_branch
      %14 = sbr.rel (0) target = $region5
    $region4: #{dqn_forward.1} parent=1 // pred_region
      _
    $region5: #{dqn_forward.1} parent=1 // pred_fallthru
      _
    // Predicated region
    $region6: #{dqn_forward.1} parent=1 // pred_check
      _
    $region7: #{dqn_forward.1} parent=1 // pred_check_branch
      %16 = sbr.rel (0) target = $region9
    $region8: #{dqn_forward.1} parent=1 // pred_region
      _
    $region9: #{dqn_forward.1} parent=1 // pred_fallthru
      _
    // Predicated region
    $region10: #{dqn_forward.1} parent=1 // pred_check
      _
    $region11: #{dqn_forward.1} parent=1 // pred_check_branch
      %18 = sbr.rel (0) target = $region13
    $region12: #{dqn_forward.1} parent=1 // pred_region
      _
    $region13: #{dqn_forward.1} parent=1 // pred_fallthru
      _
    // Predicated region
    $region14: #{dqn_forward.1} parent=1 // pred_check
      _
    $region15: #{dqn_forward.1} parent=1 // pred_check_branch
      %20 = sbr.rel (0) target = $region17
    $region16: #{dqn_forward.1} parent=1 // pred_region
      _
    $region17: #{dqn_forward.1} parent=1 // pred_fallthru
      _
    // Predicated region
    $region18: #{dqn_forward.1} parent=1 // pred_check
      _
    $region19: #{dqn_forward.1} parent=1 // pred_check_branch
      %22 = sbr.rel (0) target = $region21
    $region20: #{dqn_forward.1} parent=1 // pred_region
      _
    $region21: #{dqn_forward.1} parent=1 // pred_fallthru
      _
    // Predicated region
    $region22: #{dqn_forward.1} parent=1 // pred_check
      _
    $region23: #{dqn_forward.1} parent=1 // pred_check_branch
      %24 = sbr.rel (0) target = $region25
    $region24: #{dqn_forward.1} parent=1 // pred_region
      _
    $region25: #{dqn_forward.1} parent=1 // pred_fallthru
      _
    // Predicated region
    $region26: #{dqn_forward.1} parent=1 // pred_check
      _
    $region27: #{dqn_forward.1} parent=1 // pred_check_branch
      %26 = sbr.rel (0) target = $region29
    $region28: #{dqn_forward.1} parent=1 // pred_region
      _
    $region29: #{dqn_forward.1} parent=1 // pred_fallthru
      _
    %v28 = vld [vmem:[%s0] sm:$0xf]
    %v29 = vld [vmem:[%s1] sm:$0xff]
    %v30 = vld [vmem:[%s1 + $0x8] sm:$0xff]
    %v31 = vld [vmem:[%s1 + $0x10] sm:$0xff]
    %v32 = vld [vmem:[%s1 + $0x18] sm:$0xff]
    %v33 = vld [vmem:[%s1 + $0x20] sm:$0xff]
    %v34 = vld [vmem:[%s1 + $0x28] sm:$0xff]
    %v35 = vld [vmem:[%s1 + $0x30] sm:$0xff]
    %v36 = vld [vmem:[%s1 + $0x38] sm:$0xff]
    %v37 = vld [vmem:[%s1 + $0x40] sm:$0xff]
    %v38 = vld [vmem:[%s1 + $0x48] sm:$0xff]
    %v39 = vld [vmem:[%s1 + $0x50] sm:$0xff]
    %v40 = vld [vmem:[%s1 + $0x58] sm:$0xff]
    %v41 = vld [vmem:[%s1 + $0x60] sm:$0xff]
    %v42 = vld [vmem:[%s1 + $0x68] sm:$0xff]
    %v43 = vld [vmem:[%s1 + $0x70] sm:$0xff]
    %v44 = vld [vmem:[%s1 + $0x78] sm:$0xff]
    %v45 = vld [vmem:[%s2] sm:$0xff]
    %v47 = vperm.slane %v45, 0
    %v48 = vperm.slane %v45, 1
    %v49 = vperm.slane %v45, 2
    %v50 = vperm.slane %v45, 3
    %v51 = vperm.slane %v45, 4
    %v52 = vperm.slane %v45, 5
    %v53 = vperm.slane %v45, 6
    %v54 = vperm.slane %v45, 7
    %v79 = vunpack.c.l.b16 %v29
    %v80 = vunpack.c.h.b16 %v29
    %v81 = vunpack.c.l.b16 %v30
    %v82 = vunpack.c.h.b16 %v30
    %v83 = vunpack.c.l.b16 %v31
    %v84 = vunpack.c.h.b16 %v31
    %v85 = vunpack.c.l.b16 %v32
    %v86 = vunpack.c.h.b16 %v32
    %v87 = vunpack.c.l.b16 %v33
    %v88 = vunpack.c.h.b16 %v33
    %v89 = vunpack.c.l.b16 %v34
    %v90 = vunpack.c.h.b16 %v34
    %v91 = vunpack.c.l.b16 %v35
    %v92 = vunpack.c.h.b16 %v35
    %v93 = vunpack.c.l.b16 %v36
    %v94 = vunpack.c.h.b16 %v36
    %v95 = vunpack.c.l.b16 %v37
    %v96 = vunpack.c.h.b16 %v37
    %v97 = vunpack.c.l.b16 %v38
    %v98 = vunpack.c.h.b16 %v38
    %v99 = vunpack.c.l.b16 %v39
    %v100 = vunpack.c.h.b16 %v39
    %v101 = vunpack.c.l.b16 %v40
    %v102 = vunpack.c.h.b16 %v40
    %v103 = vunpack.c.l.b16 %v41
    %v104 = vunpack.c.h.b16 %v41
    %v105 = vunpack.c.l.b16 %v42
    %v106 = vunpack.c.h.b16 %v42
    %v107 = vunpack.c.l.b16 %v43
    %v108 = vunpack.c.h.b16 %v43
    %v109 = vunpack.c.l.b16 %v44
    %v110 = vunpack.c.h.b16 %v44
    %v111 = vpack.c.b16 %v87, %v79
    %v112 = vpack.c.b16 %v88, %v80
    %v113 = vpack.c.b16 %v89, %v81
    %v114 = vpack.c.b16 %v90, %v82
    %v115 = vpack.c.b16 %v91, %v83
    %v116 = vpack.c.b16 %v92, %v84
    %v117 = vpack.c.b16 %v93, %v85
    %v118 = vpack.c.b16 %v94, %v86
    %v119 = vpack.c.b16 %v103, %v95
    %v120 = vpack.c.b16 %v104, %v96
    %v121 = vpack.c.b16 %v105, %v97
    %v122 = vpack.c.b16 %v106, %v98
    %v123 = vpack.c.b16 %v107, %v99
    %v124 = vpack.c.b16 %v108, %v100
    %v125 = vpack.c.b16 %v109, %v101
    %v126 = vpack.c.b16 %v110, %v102
    %vm143 = vcmask 261120
    %v145 = vsel %vm143, %v28, 0
    %147 = vmatpush.bf16.msra.mxu0 0
    %148 = vmatpush.bf16.msra.mxu0 0
    %149 = vmatpush.bf16.msra.mxu0 0
    %150 = vmatpush.bf16.msra.mxu0 0
    %151 = vmatpush.bf16.msra.mxu0 0
    %152 = vmatpush.bf16.msra.mxu0 0
    %153 = vmatpush.bf16.msra.mxu0 %v119
    %154 = vmatpush.bf16.msra.mxu0 %v111
    %155 = vmatmul.bf16.gmra.mxu0 %v145
    %v156 = vpop.f32.mrf.mxu0
    %v157 = vadd.f32 %v47, %v156
    %v158 = vpop.f32.mrf.mxu0
    %159 = vdwg.mxu0
    %160 = vmatpush.bf16.msra.mxu0 0
    %161 = vmatpush.bf16.msra.mxu0 0
    %162 = vmatpush.bf16.msra.mxu0 0
    %163 = vmatpush.bf16.msra.mxu0 0
    %164 = vmatpush.bf16.msra.mxu0 0
    %165 = vmatpush.bf16.msra.mxu0 0
    %166 = vmatpush.bf16.msra.mxu0 %v120
    %167 = vmatpush.bf16.msra.mxu0 %v112
    %168 = vmatmul.bf16.gmra.mxu0 %v145
    %v169 = vpop.f32.mrf.mxu0
    %v170 = vadd.f32 %v48, %v169
    %v171 = vpop.f32.mrf.mxu0
    %172 = vdwg.mxu0
    %173 = vmatpush.bf16.msra.mxu0 0
    %174 = vmatpush.bf16.msra.mxu0 0
    %175 = vmatpush.bf16.msra.mxu0 0
    %176 = vmatpush.bf16.msra.mxu0 0
    %177 = vmatpush.bf16.msra.mxu0 0
    %178 = vmatpush.bf16.msra.mxu0 0
    %179 = vmatpush.bf16.msra.mxu0 %v121
    %180 = vmatpush.bf16.msra.mxu0 %v113
    %181 = vmatmul.bf16.gmra.mxu0 %v145
    %v182 = vpop.f32.mrf.mxu0
    %v183 = vadd.f32 %v49, %v182
    %v184 = vpop.f32.mrf.mxu0
    %185 = vdwg.mxu0
    %186 = vmatpush.bf16.msra.mxu0 0
    %187 = vmatpush.bf16.msra.mxu0 0
    %188 = vmatpush.bf16.msra.mxu0 0
    %189 = vmatpush.bf16.msra.mxu0 0
    %190 = vmatpush.bf16.msra.mxu0 0
    %191 = vmatpush.bf16.msra.mxu0 0
    %192 = vmatpush.bf16.msra.mxu0 %v122
    %193 = vmatpush.bf16.msra.mxu0 %v114
    %194 = vmatmul.bf16.gmra.mxu0 %v145
    %v195 = vpop.f32.mrf.mxu0
    %v196 = vadd.f32 %v50, %v195
    %v197 = vpop.f32.mrf.mxu0
    %198 = vdwg.mxu0
    %199 = vmatpush.bf16.msra.mxu0 0
    %200 = vmatpush.bf16.msra.mxu0 0
    %201 = vmatpush.bf16.msra.mxu0 0
    %202 = vmatpush.bf16.msra.mxu0 0
    %203 = vmatpush.bf16.msra.mxu0 0
    %204 = vmatpush.bf16.msra.mxu0 0
    %205 = vmatpush.bf16.msra.mxu0 %v123
    %206 = vmatpush.bf16.msra.mxu0 %v115
    %207 = vmatmul.bf16.gmra.mxu0 %v145
    %v208 = vpop.f32.mrf.mxu0
    %v209 = vadd.f32 %v51, %v208
    %v210 = vpop.f32.mrf.mxu0
    %211 = vdwg.mxu0
    %212 = vmatpush.bf16.msra.mxu0 0
    %213 = vmatpush.bf16.msra.mxu0 0
    %214 = vmatpush.bf16.msra.mxu0 0
    %215 = vmatpush.bf16.msra.mxu0 0
    %216 = vmatpush.bf16.msra.mxu0 0
    %217 = vmatpush.bf16.msra.mxu0 0
    %218 = vmatpush.bf16.msra.mxu0 %v124
    %219 = vmatpush.bf16.msra.mxu0 %v116
    %220 = vmatmul.bf16.gmra.mxu0 %v145
    %v221 = vpop.f32.mrf.mxu0
    %v222 = vadd.f32 %v52, %v221
    %v223 = vpop.f32.mrf.mxu0
    %224 = vdwg.mxu0
    %225 = vmatpush.bf16.msra.mxu0 0
    %226 = vmatpush.bf16.msra.mxu0 0
    %227 = vmatpush.bf16.msra.mxu0 0
    %228 = vmatpush.bf16.msra.mxu0 0
    %229 = vmatpush.bf16.msra.mxu0 0
    %230 = vmatpush.bf16.msra.mxu0 0
    %231 = vmatpush.bf16.msra.mxu0 %v125
    %232 = vmatpush.bf16.msra.mxu0 %v117
    %233 = vmatmul.bf16.gmra.mxu0 %v145
    %v234 = vpop.f32.mrf.mxu0
    %v235 = vadd.f32 %v53, %v234
    %v236 = vpop.f32.mrf.mxu0
    %237 = vdwg.mxu0
    %238 = vmatpush.bf16.msra.mxu0 0
    %239 = vmatpush.bf16.msra.mxu0 0
    %240 = vmatpush.bf16.msra.mxu0 0
    %241 = vmatpush.bf16.msra.mxu0 0
    %242 = vmatpush.bf16.msra.mxu0 0
    %243 = vmatpush.bf16.msra.mxu0 0
    %244 = vmatpush.bf16.msra.mxu0 %v126
    %245 = vmatpush.bf16.msra.mxu0 %v118
    %246 = vmatmul.bf16.gmra.mxu0 %v145
    %v247 = vpop.f32.mrf.mxu0
    %v248 = vadd.f32 %v54, %v247
    %v249 = vpop.f32.mrf.mxu0
    %250 = vdwg.mxu0
    %v251 = vmax.f32 %v157, 0.0
    %v252 = vmax.f32 %v170, 0.0
    %v253 = vmax.f32 %v183, 0.0
    %v254 = vmax.f32 %v196, 0.0
    %v255 = vmax.f32 %v209, 0.0
    %v256 = vmax.f32 %v222, 0.0
    %v257 = vmax.f32 %v235, 0.0
    %v258 = vmax.f32 %v248, 0.0
    %v259 = vpack.c.bf16 %v251, %v251
    %v260 = vpack.c.bf16 %v252, %v252
    %v261 = vpack.c.bf16 %v253, %v253
    %v262 = vpack.c.bf16 %v254, %v254
    %v263 = vpack.c.bf16 %v255, %v255
    %v264 = vpack.c.bf16 %v256, %v256
    %v265 = vpack.c.bf16 %v257, %v257
    %v266 = vpack.c.bf16 %v258, %v258
    %v267 = vld [vmem:[%s3] sm:$0xff]
    %v268 = vld [vmem:[%s3 + $0x8] sm:$0xff]
    %v269 = vld [vmem:[%s3 + $0x10] sm:$0xff]
    %v270 = vld [vmem:[%s3 + $0x18] sm:$0xff]
    %v271 = vld [vmem:[%s3 + $0x20] sm:$0xff]
    %v272 = vld [vmem:[%s3 + $0x28] sm:$0xff]
    %v273 = vld [vmem:[%s3 + $0x30] sm:$0xff]
    %v274 = vld [vmem:[%s3 + $0x38] sm:$0xff]
    %v275 = vld [vmem:[%s3 + $0x40] sm:$0xff]
    %v276 = vld [vmem:[%s3 + $0x48] sm:$0xff]
    %v277 = vld [vmem:[%s3 + $0x50] sm:$0xff]
    %v278 = vld [vmem:[%s3 + $0x58] sm:$0xff]
    %v279 = vld [vmem:[%s3 + $0x60] sm:$0xff]
    %v280 = vld [vmem:[%s3 + $0x68] sm:$0xff]
    %v281 = vld [vmem:[%s3 + $0x70] sm:$0xff]
    %v282 = vld [vmem:[%s3 + $0x78] sm:$0xff]
    %v283 = vld [vmem:[%s3 + $0x80] sm:$0xff]
    %v284 = vld [vmem:[%s3 + $0x88] sm:$0xff]
    %v285 = vld [vmem:[%s3 + $0x90] sm:$0xff]
    %v286 = vld [vmem:[%s3 + $0x98] sm:$0xff]
    %v287 = vld [vmem:[%s3 + $0xa0] sm:$0xff]
    %v288 = vld [vmem:[%s3 + $0xa8] sm:$0xff]
    %v289 = vld [vmem:[%s3 + $0xb0] sm:$0xff]
    %v290 = vld [vmem:[%s3 + $0xb8] sm:$0xff]
    %v291 = vld [vmem:[%s3 + $0xc0] sm:$0xff]
    %v292 = vld [vmem:[%s3 + $0xc8] sm:$0xff]
    %v293 = vld [vmem:[%s3 + $0xd0] sm:$0xff]
    %v294 = vld [vmem:[%s3 + $0xd8] sm:$0xff]
    %v295 = vld [vmem:[%s3 + $0xe0] sm:$0xff]
    %v296 = vld [vmem:[%s3 + $0xe8] sm:$0xff]
    %v297 = vld [vmem:[%s3 + $0xf0] sm:$0xff]
    %v298 = vld [vmem:[%s3 + $0xf8] sm:$0xff]
    %v299 = vld [vmem:[%s3 + $0x100] sm:$0xff]
    %v300 = vld [vmem:[%s3 + $0x108] sm:$0xff]
    %v301 = vld [vmem:[%s3 + $0x110] sm:$0xff]
    %v302 = vld [vmem:[%s3 + $0x118] sm:$0xff]
    %v303 = vld [vmem:[%s3 + $0x120] sm:$0xff]
    %v304 = vld [vmem:[%s3 + $0x128] sm:$0xff]
    %v305 = vld [vmem:[%s3 + $0x130] sm:$0xff]
    %v306 = vld [vmem:[%s3 + $0x138] sm:$0xff]
    %v307 = vld [vmem:[%s3 + $0x140] sm:$0xff]
    %v308 = vld [vmem:[%s3 + $0x148] sm:$0xff]
    %v309 = vld [vmem:[%s3 + $0x150] sm:$0xff]
    %v310 = vld [vmem:[%s3 + $0x158] sm:$0xff]
    %v311 = vld [vmem:[%s3 + $0x160] sm:$0xff]
    %v312 = vld [vmem:[%s3 + $0x168] sm:$0xff]
    %v313 = vld [vmem:[%s3 + $0x170] sm:$0xff]
    %v314 = vld [vmem:[%s3 + $0x178] sm:$0xff]
    %v315 = vld [vmem:[%s3 + $0x180] sm:$0xff]
    %v316 = vld [vmem:[%s3 + $0x188] sm:$0xff]
    %v317 = vld [vmem:[%s3 + $0x190] sm:$0xff]
    %v318 = vld [vmem:[%s3 + $0x198] sm:$0xff]
    %v319 = vld [vmem:[%s3 + $0x1a0] sm:$0xff]
    %v320 = vld [vmem:[%s3 + $0x1a8] sm:$0xff]
    %v321 = vld [vmem:[%s3 + $0x1b0] sm:$0xff]
    %v322 = vld [vmem:[%s3 + $0x1b8] sm:$0xff]
    %v323 = vld [vmem:[%s3 + $0x1c0] sm:$0xff]
    %v324 = vld [vmem:[%s3 + $0x1c8] sm:$0xff]
    %v325 = vld [vmem:[%s3 + $0x1d0] sm:$0xff]
    %v326 = vld [vmem:[%s3 + $0x1d8] sm:$0xff]
    %v327 = vld [vmem:[%s3 + $0x1e0] sm:$0xff]
    %v328 = vld [vmem:[%s3 + $0x1e8] sm:$0xff]
    %v329 = vld [vmem:[%s3 + $0x1f0] sm:$0xff]
    %v330 = vld [vmem:[%s3 + $0x1f8] sm:$0xff]
    %v331 = vld [vmem:[%s3 + $0x200] sm:$0xff]
    %v332 = vld [vmem:[%s3 + $0x208] sm:$0xff]
    %v333 = vld [vmem:[%s3 + $0x210] sm:$0xff]
    %v334 = vld [vmem:[%s3 + $0x218] sm:$0xff]
    %v335 = vld [vmem:[%s3 + $0x220] sm:$0xff]
    %v336 = vld [vmem:[%s3 + $0x228] sm:$0xff]
    %v337 = vld [vmem:[%s3 + $0x230] sm:$0xff]
    %v338 = vld [vmem:[%s3 + $0x238] sm:$0xff]
    %v339 = vld [vmem:[%s3 + $0x240] sm:$0xff]
    %v340 = vld [vmem:[%s3 + $0x248] sm:$0xff]
    %v341 = vld [vmem:[%s3 + $0x250] sm:$0xff]
    %v342 = vld [vmem:[%s3 + $0x258] sm:$0xff]
    %v343 = vld [vmem:[%s3 + $0x260] sm:$0xff]
    %v344 = vld [vmem:[%s3 + $0x268] sm:$0xff]
    %v345 = vld [vmem:[%s3 + $0x270] sm:$0xff]
    %v346 = vld [vmem:[%s3 + $0x278] sm:$0xff]
    %v347 = vld [vmem:[%s3 + $0x280] sm:$0xff]
    %v348 = vld [vmem:[%s3 + $0x288] sm:$0xff]
    %v349 = vld [vmem:[%s3 + $0x290] sm:$0xff]
    %v350 = vld [vmem:[%s3 + $0x298] sm:$0xff]
    %v351 = vld [vmem:[%s3 + $0x2a0] sm:$0xff]
    %v352 = vld [vmem:[%s3 + $0x2a8] sm:$0xff]
    %v353 = vld [vmem:[%s3 + $0x2b0] sm:$0xff]
    %v354 = vld [vmem:[%s3 + $0x2b8] sm:$0xff]
    %v355 = vld [vmem:[%s3 + $0x2c0] sm:$0xff]
    %v356 = vld [vmem:[%s3 + $0x2c8] sm:$0xff]
    %v357 = vld [vmem:[%s3 + $0x2d0] sm:$0xff]
    %v358 = vld [vmem:[%s3 + $0x2d8] sm:$0xff]
    %v359 = vld [vmem:[%s3 + $0x2e0] sm:$0xff]
    %v360 = vld [vmem:[%s3 + $0x2e8] sm:$0xff]
    %v361 = vld [vmem:[%s3 + $0x2f0] sm:$0xff]
    %v362 = vld [vmem:[%s3 + $0x2f8] sm:$0xff]
    %v363 = vld [vmem:[%s3 + $0x300] sm:$0xff]
    %v364 = vld [vmem:[%s3 + $0x308] sm:$0xff]
    %v365 = vld [vmem:[%s3 + $0x310] sm:$0xff]
    %v366 = vld [vmem:[%s3 + $0x318] sm:$0xff]
    %v367 = vld [vmem:[%s3 + $0x320] sm:$0xff]
    %v368 = vld [vmem:[%s3 + $0x328] sm:$0xff]
    %v369 = vld [vmem:[%s3 + $0x330] sm:$0xff]
    %v370 = vld [vmem:[%s3 + $0x338] sm:$0xff]
    %v371 = vld [vmem:[%s3 + $0x340] sm:$0xff]
    %v372 = vld [vmem:[%s3 + $0x348] sm:$0xff]
    %v373 = vld [vmem:[%s3 + $0x350] sm:$0xff]
    %v374 = vld [vmem:[%s3 + $0x358] sm:$0xff]
    %v375 = vld [vmem:[%s3 + $0x360] sm:$0xff]
    %v376 = vld [vmem:[%s3 + $0x368] sm:$0xff]
    %v377 = vld [vmem:[%s3 + $0x370] sm:$0xff]
    %v378 = vld [vmem:[%s3 + $0x378] sm:$0xff]
    %v379 = vld [vmem:[%s3 + $0x380] sm:$0xff]
    %v380 = vld [vmem:[%s3 + $0x388] sm:$0xff]
    %v381 = vld [vmem:[%s3 + $0x390] sm:$0xff]
    %v382 = vld [vmem:[%s3 + $0x398] sm:$0xff]
    %v383 = vld [vmem:[%s3 + $0x3a0] sm:$0xff]
    %v384 = vld [vmem:[%s3 + $0x3a8] sm:$0xff]
    %v385 = vld [vmem:[%s3 + $0x3b0] sm:$0xff]
    %v386 = vld [vmem:[%s3 + $0x3b8] sm:$0xff]
    %v387 = vld [vmem:[%s3 + $0x3c0] sm:$0xff]
    %v388 = vld [vmem:[%s3 + $0x3c8] sm:$0xff]
    %v389 = vld [vmem:[%s3 + $0x3d0] sm:$0xff]
    %v390 = vld [vmem:[%s3 + $0x3d8] sm:$0xff]
    %v391 = vld [vmem:[%s3 + $0x3e0] sm:$0xff]
    %v392 = vld [vmem:[%s3 + $0x3e8] sm:$0xff]
    %v393 = vld [vmem:[%s3 + $0x3f0] sm:$0xff]
    %v394 = vld [vmem:[%s3 + $0x3f8] sm:$0xff]
    %v395 = vld [vmem:[%s3 + $0x400] sm:$0xff]
    %v396 = vld [vmem:[%s3 + $0x408] sm:$0xff]
    %v397 = vld [vmem:[%s3 + $0x410] sm:$0xff]
    %v398 = vld [vmem:[%s3 + $0x418] sm:$0xff]
    %v399 = vld [vmem:[%s3 + $0x420] sm:$0xff]
    %v400 = vld [vmem:[%s3 + $0x428] sm:$0xff]
    %v401 = vld [vmem:[%s3 + $0x430] sm:$0xff]
    %v402 = vld [vmem:[%s3 + $0x438] sm:$0xff]
    %v403 = vld [vmem:[%s3 + $0x440] sm:$0xff]
    %v404 = vld [vmem:[%s3 + $0x448] sm:$0xff]
    %v405 = vld [vmem:[%s3 + $0x450] sm:$0xff]
    %v406 = vld [vmem:[%s3 + $0x458] sm:$0xff]
    %v407 = vld [vmem:[%s3 + $0x460] sm:$0xff]
    %v408 = vld [vmem:[%s3 + $0x468] sm:$0xff]
    %v409 = vld [vmem:[%s3 + $0x470] sm:$0xff]
    %v410 = vld [vmem:[%s3 + $0x478] sm:$0xff]
    %v411 = vld [vmem:[%s3 + $0x480] sm:$0xff]
    %v412 = vld [vmem:[%s3 + $0x488] sm:$0xff]
    %v413 = vld [vmem:[%s3 + $0x490] sm:$0xff]
    %v414 = vld [vmem:[%s3 + $0x498] sm:$0xff]
    %v415 = vld [vmem:[%s3 + $0x4a0] sm:$0xff]
    %v416 = vld [vmem:[%s3 + $0x4a8] sm:$0xff]
    %v417 = vld [vmem:[%s3 + $0x4b0] sm:$0xff]
    %v418 = vld [vmem:[%s3 + $0x4b8] sm:$0xff]
    %v419 = vld [vmem:[%s3 + $0x4c0] sm:$0xff]
    %v420 = vld [vmem:[%s3 + $0x4c8] sm:$0xff]
    %v421 = vld [vmem:[%s3 + $0x4d0] sm:$0xff]
    %v422 = vld [vmem:[%s3 + $0x4d8] sm:$0xff]
    %v423 = vld [vmem:[%s3 + $0x4e0] sm:$0xff]
    %v424 = vld [vmem:[%s3 + $0x4e8] sm:$0xff]
    %v425 = vld [vmem:[%s3 + $0x4f0] sm:$0xff]
    %v426 = vld [vmem:[%s3 + $0x4f8] sm:$0xff]
    %v427 = vld [vmem:[%s3 + $0x500] sm:$0xff]
    %v428 = vld [vmem:[%s3 + $0x508] sm:$0xff]
    %v429 = vld [vmem:[%s3 + $0x510] sm:$0xff]
    %v430 = vld [vmem:[%s3 + $0x518] sm:$0xff]
    %v431 = vld [vmem:[%s3 + $0x520] sm:$0xff]
    %v432 = vld [vmem:[%s3 + $0x528] sm:$0xff]
    %v433 = vld [vmem:[%s3 + $0x530] sm:$0xff]
    %v434 = vld [vmem:[%s3 + $0x538] sm:$0xff]
    %v435 = vld [vmem:[%s3 + $0x540] sm:$0xff]
    %v436 = vld [vmem:[%s3 + $0x548] sm:$0xff]
    %v437 = vld [vmem:[%s3 + $0x550] sm:$0xff]
    %v438 = vld [vmem:[%s3 + $0x558] sm:$0xff]
    %v439 = vld [vmem:[%s3 + $0x560] sm:$0xff]
    %v440 = vld [vmem:[%s3 + $0x568] sm:$0xff]
    %v441 = vld [vmem:[%s3 + $0x570] sm:$0xff]
    %v442 = vld [vmem:[%s3 + $0x578] sm:$0xff]
    %v443 = vld [vmem:[%s3 + $0x580] sm:$0xff]
    %v444 = vld [vmem:[%s3 + $0x588] sm:$0xff]
    %v445 = vld [vmem:[%s3 + $0x590] sm:$0xff]
    %v446 = vld [vmem:[%s3 + $0x598] sm:$0xff]
    %v447 = vld [vmem:[%s3 + $0x5a0] sm:$0xff]
    %v448 = vld [vmem:[%s3 + $0x5a8] sm:$0xff]
    %v449 = vld [vmem:[%s3 + $0x5b0] sm:$0xff]
    %v450 = vld [vmem:[%s3 + $0x5b8] sm:$0xff]
    %v451 = vld [vmem:[%s3 + $0x5c0] sm:$0xff]
    %v452 = vld [vmem:[%s3 + $0x5c8] sm:$0xff]
    %v453 = vld [vmem:[%s3 + $0x5d0] sm:$0xff]
    %v454 = vld [vmem:[%s3 + $0x5d8] sm:$0xff]
    %v455 = vld [vmem:[%s3 + $0x5e0] sm:$0xff]
    %v456 = vld [vmem:[%s3 + $0x5e8] sm:$0xff]
    %v457 = vld [vmem:[%s3 + $0x5f0] sm:$0xff]
    %v458 = vld [vmem:[%s3 + $0x5f8] sm:$0xff]
    %v459 = vld [vmem:[%s3 + $0x600] sm:$0xff]
    %v460 = vld [vmem:[%s3 + $0x608] sm:$0xff]
    %v461 = vld [vmem:[%s3 + $0x610] sm:$0xff]
    %v462 = vld [vmem:[%s3 + $0x618] sm:$0xff]
    %v463 = vld [vmem:[%s3 + $0x620] sm:$0xff]
    %v464 = vld [vmem:[%s3 + $0x628] sm:$0xff]
    %v465 = vld [vmem:[%s3 + $0x630] sm:$0xff]
    %v466 = vld [vmem:[%s3 + $0x638] sm:$0xff]
    %v467 = vld [vmem:[%s3 + $0x640] sm:$0xff]
    %v468 = vld [vmem:[%s3 + $0x648] sm:$0xff]
    %v469 = vld [vmem:[%s3 + $0x650] sm:$0xff]
    %v470 = vld [vmem:[%s3 + $0x658] sm:$0xff]
    %v471 = vld [vmem:[%s3 + $0x660] sm:$0xff]
    %v472 = vld [vmem:[%s3 + $0x668] sm:$0xff]
    %v473 = vld [vmem:[%s3 + $0x670] sm:$0xff]
    %v474 = vld [vmem:[%s3 + $0x678] sm:$0xff]
    %v475 = vld [vmem:[%s3 + $0x680] sm:$0xff]
    %v476 = vld [vmem:[%s3 + $0x688] sm:$0xff]
    %v477 = vld [vmem:[%s3 + $0x690] sm:$0xff]
    %v478 = vld [vmem:[%s3 + $0x698] sm:$0xff]
    %v479 = vld [vmem:[%s3 + $0x6a0] sm:$0xff]
    %v480 = vld [vmem:[%s3 + $0x6a8] sm:$0xff]
    %v481 = vld [vmem:[%s3 + $0x6b0] sm:$0xff]
    %v482 = vld [vmem:[%s3 + $0x6b8] sm:$0xff]
    %v483 = vld [vmem:[%s3 + $0x6c0] sm:$0xff]
    %v484 = vld [vmem:[%s3 + $0x6c8] sm:$0xff]
    %v485 = vld [vmem:[%s3 + $0x6d0] sm:$0xff]
    %v486 = vld [vmem:[%s3 + $0x6d8] sm:$0xff]
    %v487 = vld [vmem:[%s3 + $0x6e0] sm:$0xff]
    %v488 = vld [vmem:[%s3 + $0x6e8] sm:$0xff]
    %v489 = vld [vmem:[%s3 + $0x6f0] sm:$0xff]
    %v490 = vld [vmem:[%s3 + $0x6f8] sm:$0xff]
    %v491 = vld [vmem:[%s3 + $0x700] sm:$0xff]
    %v492 = vld [vmem:[%s3 + $0x708] sm:$0xff]
    %v493 = vld [vmem:[%s3 + $0x710] sm:$0xff]
    %v494 = vld [vmem:[%s3 + $0x718] sm:$0xff]
    %v495 = vld [vmem:[%s3 + $0x720] sm:$0xff]
    %v496 = vld [vmem:[%s3 + $0x728] sm:$0xff]
    %v497 = vld [vmem:[%s3 + $0x730] sm:$0xff]
    %v498 = vld [vmem:[%s3 + $0x738] sm:$0xff]
    %v499 = vld [vmem:[%s3 + $0x740] sm:$0xff]
    %v500 = vld [vmem:[%s3 + $0x748] sm:$0xff]
    %v501 = vld [vmem:[%s3 + $0x750] sm:$0xff]
    %v502 = vld [vmem:[%s3 + $0x758] sm:$0xff]
    %v503 = vld [vmem:[%s3 + $0x760] sm:$0xff]
    %v504 = vld [vmem:[%s3 + $0x768] sm:$0xff]
    %v505 = vld [vmem:[%s3 + $0x770] sm:$0xff]
    %v506 = vld [vmem:[%s3 + $0x778] sm:$0xff]
    %v507 = vld [vmem:[%s3 + $0x780] sm:$0xff]
    %v508 = vld [vmem:[%s3 + $0x788] sm:$0xff]
    %v509 = vld [vmem:[%s3 + $0x790] sm:$0xff]
    %v510 = vld [vmem:[%s3 + $0x798] sm:$0xff]
    %v511 = vld [vmem:[%s3 + $0x7a0] sm:$0xff]
    %v512 = vld [vmem:[%s3 + $0x7a8] sm:$0xff]
    %v513 = vld [vmem:[%s3 + $0x7b0] sm:$0xff]
    %v514 = vld [vmem:[%s3 + $0x7b8] sm:$0xff]
    %v515 = vld [vmem:[%s3 + $0x7c0] sm:$0xff]
    %v516 = vld [vmem:[%s3 + $0x7c8] sm:$0xff]
    %v517 = vld [vmem:[%s3 + $0x7d0] sm:$0xff]
    %v518 = vld [vmem:[%s3 + $0x7d8] sm:$0xff]
    %v519 = vld [vmem:[%s3 + $0x7e0] sm:$0xff]
    %v520 = vld [vmem:[%s3 + $0x7e8] sm:$0xff]
    %v521 = vld [vmem:[%s3 + $0x7f0] sm:$0xff]
    %v522 = vld [vmem:[%s3 + $0x7f8] sm:$0xff]
    %v523 = vld [vmem:[%s4] sm:$0xf]
    %v525 = vperm.slane %v523, 0
    %v526 = vperm.slane %v523, 1
    %v527 = vperm.slane %v523, 2
    %v528 = vperm.slane %v523, 3
    %v789 = vunpack.c.l.b16 %v267
    %v790 = vunpack.c.h.b16 %v267
    %v791 = vunpack.c.l.b16 %v268
    %v792 = vunpack.c.h.b16 %v268
    %v793 = vunpack.c.l.b16 %v269
    %v794 = vunpack.c.h.b16 %v269
    %v795 = vunpack.c.l.b16 %v270
    %v796 = vunpack.c.h.b16 %v270
    %v797 = vunpack.c.l.b16 %v271
    %v798 = vunpack.c.h.b16 %v271
    %v799 = vunpack.c.l.b16 %v272
    %v800 = vunpack.c.h.b16 %v272
    %v801 = vunpack.c.l.b16 %v273
    %v802 = vunpack.c.h.b16 %v273
    %v803 = vunpack.c.l.b16 %v274
    %v804 = vunpack.c.h.b16 %v274
    %v805 = vunpack.c.l.b16 %v275
    %v806 = vunpack.c.h.b16 %v275
    %v807 = vunpack.c.l.b16 %v276
    %v808 = vunpack.c.h.b16 %v276
    %v809 = vunpack.c.l.b16 %v277
    %v810 = vunpack.c.h.b16 %v277
    %v811 = vunpack.c.l.b16 %v278
    %v812 = vunpack.c.h.b16 %v278
    %v813 = vunpack.c.l.b16 %v279
    %v814 = vunpack.c.h.b16 %v279
    %v815 = vunpack.c.l.b16 %v280
    %v816 = vunpack.c.h.b16 %v280
    %v817 = vunpack.c.l.b16 %v281
    %v818 = vunpack.c.h.b16 %v281
    %v819 = vunpack.c.l.b16 %v282
    %v820 = vunpack.c.h.b16 %v282
    %v821 = vunpack.c.l.b16 %v283
    %v822 = vunpack.c.h.b16 %v283
    %v823 = vunpack.c.l.b16 %v284
    %v824 = vunpack.c.h.b16 %v284
    %v825 = vunpack.c.l.b16 %v285
    %v826 = vunpack.c.h.b16 %v285
    %v827 = vunpack.c.l.b16 %v286
    %v828 = vunpack.c.h.b16 %v286
    %v829 = vunpack.c.l.b16 %v287
    %v830 = vunpack.c.h.b16 %v287
    %v831 = vunpack.c.l.b16 %v288
    %v832 = vunpack.c.h.b16 %v288
    %v833 = vunpack.c.l.b16 %v289
    %v834 = vunpack.c.h.b16 %v289
    %v835 = vunpack.c.l.b16 %v290
    %v836 = vunpack.c.h.b16 %v290
    %v837 = vunpack.c.l.b16 %v291
    %v838 = vunpack.c.h.b16 %v291
    %v839 = vunpack.c.l.b16 %v292
    %v840 = vunpack.c.h.b16 %v292
    %v841 = vunpack.c.l.b16 %v293
    %v842 = vunpack.c.h.b16 %v293
    %v843 = vunpack.c.l.b16 %v294
    %v844 = vunpack.c.h.b16 %v294
    %v845 = vunpack.c.l.b16 %v295
    %v846 = vunpack.c.h.b16 %v295
    %v847 = vunpack.c.l.b16 %v296
    %v848 = vunpack.c.h.b16 %v296
    %v849 = vunpack.c.l.b16 %v297
    %v850 = vunpack.c.h.b16 %v297
    %v851 = vunpack.c.l.b16 %v298
    %v852 = vunpack.c.h.b16 %v298
    %v853 = vunpack.c.l.b16 %v299
    %v854 = vunpack.c.h.b16 %v299
    %v855 = vunpack.c.l.b16 %v300
    %v856 = vunpack.c.h.b16 %v300
    %v857 = vunpack.c.l.b16 %v301
    %v858 = vunpack.c.h.b16 %v301
    %v859 = vunpack.c.l.b16 %v302
    %v860 = vunpack.c.h.b16 %v302
    %v861 = vunpack.c.l.b16 %v303
    %v862 = vunpack.c.h.b16 %v303
    %v863 = vunpack.c.l.b16 %v304
    %v864 = vunpack.c.h.b16 %v304
    %v865 = vunpack.c.l.b16 %v305
    %v866 = vunpack.c.h.b16 %v305
    %v867 = vunpack.c.l.b16 %v306
    %v868 = vunpack.c.h.b16 %v306
    %v869 = vunpack.c.l.b16 %v307
    %v870 = vunpack.c.h.b16 %v307
    %v871 = vunpack.c.l.b16 %v308
    %v872 = vunpack.c.h.b16 %v308
    %v873 = vunpack.c.l.b16 %v309
    %v874 = vunpack.c.h.b16 %v309
    %v875 = vunpack.c.l.b16 %v310
    %v876 = vunpack.c.h.b16 %v310
    %v877 = vunpack.c.l.b16 %v311
    %v878 = vunpack.c.h.b16 %v311
    %v879 = vunpack.c.l.b16 %v312
    %v880 = vunpack.c.h.b16 %v312
    %v881 = vunpack.c.l.b16 %v313
    %v882 = vunpack.c.h.b16 %v313
    %v883 = vunpack.c.l.b16 %v314
    %v884 = vunpack.c.h.b16 %v314
    %v885 = vunpack.c.l.b16 %v315
    %v886 = vunpack.c.h.b16 %v315
    %v887 = vunpack.c.l.b16 %v316
    %v888 = vunpack.c.h.b16 %v316
    %v889 = vunpack.c.l.b16 %v317
    %v890 = vunpack.c.h.b16 %v317
    %v891 = vunpack.c.l.b16 %v318
    %v892 = vunpack.c.h.b16 %v318
    %v893 = vunpack.c.l.b16 %v319
    %v894 = vunpack.c.h.b16 %v319
    %v895 = vunpack.c.l.b16 %v320
    %v896 = vunpack.c.h.b16 %v320
    %v897 = vunpack.c.l.b16 %v321
    %v898 = vunpack.c.h.b16 %v321
    %v899 = vunpack.c.l.b16 %v322
    %v900 = vunpack.c.h.b16 %v322
    %v901 = vunpack.c.l.b16 %v323
    %v902 = vunpack.c.h.b16 %v323
    %v903 = vunpack.c.l.b16 %v324
    %v904 = vunpack.c.h.b16 %v324
    %v905 = vunpack.c.l.b16 %v325
    %v906 = vunpack.c.h.b16 %v325
    %v907 = vunpack.c.l.b16 %v326
    %v908 = vunpack.c.h.b16 %v326
    %v909 = vunpack.c.l.b16 %v327
    %v910 = vunpack.c.h.b16 %v327
    %v911 = vunpack.c.l.b16 %v328
    %v912 = vunpack.c.h.b16 %v328
    %v913 = vunpack.c.l.b16 %v329
    %v914 = vunpack.c.h.b16 %v329
    %v915 = vunpack.c.l.b16 %v330
    %v916 = vunpack.c.h.b16 %v330
    %v917 = vunpack.c.l.b16 %v331
    %v918 = vunpack.c.h.b16 %v331
    %v919 = vunpack.c.l.b16 %v332
    %v920 = vunpack.c.h.b16 %v332
    %v921 = vunpack.c.l.b16 %v333
    %v922 = vunpack.c.h.b16 %v333
    %v923 = vunpack.c.l.b16 %v334
    %v924 = vunpack.c.h.b16 %v334
    %v925 = vunpack.c.l.b16 %v335
    %v926 = vunpack.c.h.b16 %v335
    %v927 = vunpack.c.l.b16 %v336
    %v928 = vunpack.c.h.b16 %v336
    %v929 = vunpack.c.l.b16 %v337
    %v930 = vunpack.c.h.b16 %v337
    %v931 = vunpack.c.l.b16 %v338
    %v932 = vunpack.c.h.b16 %v338
    %v933 = vunpack.c.l.b16 %v339
    %v934 = vunpack.c.h.b16 %v339
    %v935 = vunpack.c.l.b16 %v340
    %v936 = vunpack.c.h.b16 %v340
    %v937 = vunpack.c.l.b16 %v341
    %v938 = vunpack.c.h.b16 %v341
    %v939 = vunpack.c.l.b16 %v342
    %v940 = vunpack.c.h.b16 %v342
    %v941 = vunpack.c.l.b16 %v343
    %v942 = vunpack.c.h.b16 %v343
    %v943 = vunpack.c.l.b16 %v344
    %v944 = vunpack.c.h.b16 %v344
    %v945 = vunpack.c.l.b16 %v345
    %v946 = vunpack.c.h.b16 %v345
    %v947 = vunpack.c.l.b16 %v346
    %v948 = vunpack.c.h.b16 %v346
    %v949 = vunpack.c.l.b16 %v347
    %v950 = vunpack.c.h.b16 %v347
    %v951 = vunpack.c.l.b16 %v348
    %v952 = vunpack.c.h.b16 %v348
    %v953 = vunpack.c.l.b16 %v349
    %v954 = vunpack.c.h.b16 %v349
    %v955 = vunpack.c.l.b16 %v350
    %v956 = vunpack.c.h.b16 %v350
    %v957 = vunpack.c.l.b16 %v351
    %v958 = vunpack.c.h.b16 %v351
    %v959 = vunpack.c.l.b16 %v352
    %v960 = vunpack.c.h.b16 %v352
    %v961 = vunpack.c.l.b16 %v353
    %v962 = vunpack.c.h.b16 %v353
    %v963 = vunpack.c.l.b16 %v354
    %v964 = vunpack.c.h.b16 %v354
    %v965 = vunpack.c.l.b16 %v355
    %v966 = vunpack.c.h.b16 %v355
    %v967 = vunpack.c.l.b16 %v356
    %v968 = vunpack.c.h.b16 %v356
    %v969 = vunpack.c.l.b16 %v357
    %v970 = vunpack.c.h.b16 %v357
    %v971 = vunpack.c.l.b16 %v358
    %v972 = vunpack.c.h.b16 %v358
    %v973 = vunpack.c.l.b16 %v359
    %v974 = vunpack.c.h.b16 %v359
    %v975 = vunpack.c.l.b16 %v360
    %v976 = vunpack.c.h.b16 %v360
    %v977 = vunpack.c.l.b16 %v361
    %v978 = vunpack.c.h.b16 %v361
    %v979 = vunpack.c.l.b16 %v362
    %v980 = vunpack.c.h.b16 %v362
    %v981 = vunpack.c.l.b16 %v363
    %v982 = vunpack.c.h.b16 %v363
    %v983 = vunpack.c.l.b16 %v364
    %v984 = vunpack.c.h.b16 %v364
    %v985 = vunpack.c.l.b16 %v365
    %v986 = vunpack.c.h.b16 %v365
    %v987 = vunpack.c.l.b16 %v366
    %v988 = vunpack.c.h.b16 %v366
    %v989 = vunpack.c.l.b16 %v367
    %v990 = vunpack.c.h.b16 %v367
    %v991 = vunpack.c.l.b16 %v368
    %v992 = vunpack.c.h.b16 %v368
    %v993 = vunpack.c.l.b16 %v369
    %v994 = vunpack.c.h.b16 %v369
    %v995 = vunpack.c.l.b16 %v370
    %v996 = vunpack.c.h.b16 %v370
    %v997 = vunpack.c.l.b16 %v371
    %v998 = vunpack.c.h.b16 %v371
    %v999 = vunpack.c.l.b16 %v372
    %v1000 = vunpack.c.h.b16 %v372
    %v1001 = vunpack.c.l.b16 %v373
    %v1002 = vunpack.c.h.b16 %v373
    %v1003 = vunpack.c.l.b16 %v374
    %v1004 = vunpack.c.h.b16 %v374
    %v1005 = vunpack.c.l.b16 %v375
    %v1006 = vunpack.c.h.b16 %v375
    %v1007 = vunpack.c.l.b16 %v376
    %v1008 = vunpack.c.h.b16 %v376
    %v1009 = vunpack.c.l.b16 %v377
    %v1010 = vunpack.c.h.b16 %v377
    %v1011 = vunpack.c.l.b16 %v378
    %v1012 = vunpack.c.h.b16 %v378
    %v1013 = vunpack.c.l.b16 %v379
    %v1014 = vunpack.c.h.b16 %v379
    %v1015 = vunpack.c.l.b16 %v380
    %v1016 = vunpack.c.h.b16 %v380
    %v1017 = vunpack.c.l.b16 %v381
    %v1018 = vunpack.c.h.b16 %v381
    %v1019 = vunpack.c.l.b16 %v382
    %v1020 = vunpack.c.h.b16 %v382
    %v1021 = vunpack.c.l.b16 %v383
    %v1022 = vunpack.c.h.b16 %v383
    %v1023 = vunpack.c.l.b16 %v384
    %v1024 = vunpack.c.h.b16 %v384
    %v1025 = vunpack.c.l.b16 %v385
    %v1026 = vunpack.c.h.b16 %v385
    %v1027 = vunpack.c.l.b16 %v386
    %v1028 = vunpack.c.h.b16 %v386
    %v1029 = vunpack.c.l.b16 %v387
    %v1030 = vunpack.c.h.b16 %v387
    %v1031 = vunpack.c.l.b16 %v388
    %v1032 = vunpack.c.h.b16 %v388
    %v1033 = vunpack.c.l.b16 %v389
    %v1034 = vunpack.c.h.b16 %v389
    %v1035 = vunpack.c.l.b16 %v390
    %v1036 = vunpack.c.h.b16 %v390
    %v1037 = vunpack.c.l.b16 %v391
    %v1038 = vunpack.c.h.b16 %v391
    %v1039 = vunpack.c.l.b16 %v392
    %v1040 = vunpack.c.h.b16 %v392
    %v1041 = vunpack.c.l.b16 %v393
    %v1042 = vunpack.c.h.b16 %v393
    %v1043 = vunpack.c.l.b16 %v394
    %v1044 = vunpack.c.h.b16 %v394
    %v1045 = vunpack.c.l.b16 %v395
    %v1046 = vunpack.c.h.b16 %v395
    %v1047 = vunpack.c.l.b16 %v396
    %v1048 = vunpack.c.h.b16 %v396
    %v1049 = vunpack.c.l.b16 %v397
    %v1050 = vunpack.c.h.b16 %v397
    %v1051 = vunpack.c.l.b16 %v398
    %v1052 = vunpack.c.h.b16 %v398
    %v1053 = vunpack.c.l.b16 %v399
    %v1054 = vunpack.c.h.b16 %v399
    %v1055 = vunpack.c.l.b16 %v400
    %v1056 = vunpack.c.h.b16 %v400
    %v1057 = vunpack.c.l.b16 %v401
    %v1058 = vunpack.c.h.b16 %v401
    %v1059 = vunpack.c.l.b16 %v402
    %v1060 = vunpack.c.h.b16 %v402
    %v1061 = vunpack.c.l.b16 %v403
    %v1062 = vunpack.c.h.b16 %v403
    %v1063 = vunpack.c.l.b16 %v404
    %v1064 = vunpack.c.h.b16 %v404
    %v1065 = vunpack.c.l.b16 %v405
    %v1066 = vunpack.c.h.b16 %v405
    %v1067 = vunpack.c.l.b16 %v406
    %v1068 = vunpack.c.h.b16 %v406
    %v1069 = vunpack.c.l.b16 %v407
    %v1070 = vunpack.c.h.b16 %v407
    %v1071 = vunpack.c.l.b16 %v408
    %v1072 = vunpack.c.h.b16 %v408
    %v1073 = vunpack.c.l.b16 %v409
    %v1074 = vunpack.c.h.b16 %v409
    %v1075 = vunpack.c.l.b16 %v410
    %v1076 = vunpack.c.h.b16 %v410
    %v1077 = vunpack.c.l.b16 %v411
    %v1078 = vunpack.c.h.b16 %v411
    %v1079 = vunpack.c.l.b16 %v412
    %v1080 = vunpack.c.h.b16 %v412
    %v1081 = vunpack.c.l.b16 %v413
    %v1082 = vunpack.c.h.b16 %v413
    %v1083 = vunpack.c.l.b16 %v414
    %v1084 = vunpack.c.h.b16 %v414
    %v1085 = vunpack.c.l.b16 %v415
    %v1086 = vunpack.c.h.b16 %v415
    %v1087 = vunpack.c.l.b16 %v416
    %v1088 = vunpack.c.h.b16 %v416
    %v1089 = vunpack.c.l.b16 %v417
    %v1090 = vunpack.c.h.b16 %v417
    %v1091 = vunpack.c.l.b16 %v418
    %v1092 = vunpack.c.h.b16 %v418
    %v1093 = vunpack.c.l.b16 %v419
    %v1094 = vunpack.c.h.b16 %v419
    %v1095 = vunpack.c.l.b16 %v420
    %v1096 = vunpack.c.h.b16 %v420
    %v1097 = vunpack.c.l.b16 %v421
    %v1098 = vunpack.c.h.b16 %v421
    %v1099 = vunpack.c.l.b16 %v422
    %v1100 = vunpack.c.h.b16 %v422
    %v1101 = vunpack.c.l.b16 %v423
    %v1102 = vunpack.c.h.b16 %v423
    %v1103 = vunpack.c.l.b16 %v424
    %v1104 = vunpack.c.h.b16 %v424
    %v1105 = vunpack.c.l.b16 %v425
    %v1106 = vunpack.c.h.b16 %v425
    %v1107 = vunpack.c.l.b16 %v426
    %v1108 = vunpack.c.h.b16 %v426
    %v1109 = vunpack.c.l.b16 %v427
    %v1110 = vunpack.c.h.b16 %v427
    %v1111 = vunpack.c.l.b16 %v428
    %v1112 = vunpack.c.h.b16 %v428
    %v1113 = vunpack.c.l.b16 %v429
    %v1114 = vunpack.c.h.b16 %v429
    %v1115 = vunpack.c.l.b16 %v430
    %v1116 = vunpack.c.h.b16 %v430
    %v1117 = vunpack.c.l.b16 %v431
    %v1118 = vunpack.c.h.b16 %v431
    %v1119 = vunpack.c.l.b16 %v432
    %v1120 = vunpack.c.h.b16 %v432
    %v1121 = vunpack.c.l.b16 %v433
    %v1122 = vunpack.c.h.b16 %v433
    %v1123 = vunpack.c.l.b16 %v434
    %v1124 = vunpack.c.h.b16 %v434
    %v1125 = vunpack.c.l.b16 %v435
    %v1126 = vunpack.c.h.b16 %v435
    %v1127 = vunpack.c.l.b16 %v436
    %v1128 = vunpack.c.h.b16 %v436
    %v1129 = vunpack.c.l.b16 %v437
    %v1130 = vunpack.c.h.b16 %v437
    %v1131 = vunpack.c.l.b16 %v438
    %v1132 = vunpack.c.h.b16 %v438
    %v1133 = vunpack.c.l.b16 %v439
    %v1134 = vunpack.c.h.b16 %v439
    %v1135 = vunpack.c.l.b16 %v440
    %v1136 = vunpack.c.h.b16 %v440
    %v1137 = vunpack.c.l.b16 %v441
    %v1138 = vunpack.c.h.b16 %v441
    %v1139 = vunpack.c.l.b16 %v442
    %v1140 = vunpack.c.h.b16 %v442
    %v1141 = vunpack.c.l.b16 %v443
    %v1142 = vunpack.c.h.b16 %v443
    %v1143 = vunpack.c.l.b16 %v444
    %v1144 = vunpack.c.h.b16 %v444
    %v1145 = vunpack.c.l.b16 %v445
    %v1146 = vunpack.c.h.b16 %v445
    %v1147 = vunpack.c.l.b16 %v446
    %v1148 = vunpack.c.h.b16 %v446
    %v1149 = vunpack.c.l.b16 %v447
    %v1150 = vunpack.c.h.b16 %v447
    %v1151 = vunpack.c.l.b16 %v448
    %v1152 = vunpack.c.h.b16 %v448
    %v1153 = vunpack.c.l.b16 %v449
    %v1154 = vunpack.c.h.b16 %v449
    %v1155 = vunpack.c.l.b16 %v450
    %v1156 = vunpack.c.h.b16 %v450
    %v1157 = vunpack.c.l.b16 %v451
    %v1158 = vunpack.c.h.b16 %v451
    %v1159 = vunpack.c.l.b16 %v452
    %v1160 = vunpack.c.h.b16 %v452
    %v1161 = vunpack.c.l.b16 %v453
    %v1162 = vunpack.c.h.b16 %v453
    %v1163 = vunpack.c.l.b16 %v454
    %v1164 = vunpack.c.h.b16 %v454
    %v1165 = vunpack.c.l.b16 %v455
    %v1166 = vunpack.c.h.b16 %v455
    %v1167 = vunpack.c.l.b16 %v456
    %v1168 = vunpack.c.h.b16 %v456
    %v1169 = vunpack.c.l.b16 %v457
    %v1170 = vunpack.c.h.b16 %v457
    %v1171 = vunpack.c.l.b16 %v458
    %v1172 = vunpack.c.h.b16 %v458
    %v1173 = vunpack.c.l.b16 %v459
    %v1174 = vunpack.c.h.b16 %v459
    %v1175 = vunpack.c.l.b16 %v460
    %v1176 = vunpack.c.h.b16 %v460
    %v1177 = vunpack.c.l.b16 %v461
    %v1178 = vunpack.c.h.b16 %v461
    %v1179 = vunpack.c.l.b16 %v462
    %v1180 = vunpack.c.h.b16 %v462
    %v1181 = vunpack.c.l.b16 %v463
    %v1182 = vunpack.c.h.b16 %v463
    %v1183 = vunpack.c.l.b16 %v464
    %v1184 = vunpack.c.h.b16 %v464
    %v1185 = vunpack.c.l.b16 %v465
    %v1186 = vunpack.c.h.b16 %v465
    %v1187 = vunpack.c.l.b16 %v466
    %v1188 = vunpack.c.h.b16 %v466
    %v1189 = vunpack.c.l.b16 %v467
    %v1190 = vunpack.c.h.b16 %v467
    %v1191 = vunpack.c.l.b16 %v468
    %v1192 = vunpack.c.h.b16 %v468
    %v1193 = vunpack.c.l.b16 %v469
    %v1194 = vunpack.c.h.b16 %v469
    %v1195 = vunpack.c.l.b16 %v470
    %v1196 = vunpack.c.h.b16 %v470
    %v1197 = vunpack.c.l.b16 %v471
    %v1198 = vunpack.c.h.b16 %v471
    %v1199 = vunpack.c.l.b16 %v472
    %v1200 = vunpack.c.h.b16 %v472
    %v1201 = vunpack.c.l.b16 %v473
    %v1202 = vunpack.c.h.b16 %v473
    %v1203 = vunpack.c.l.b16 %v474
    %v1204 = vunpack.c.h.b16 %v474
    %v1205 = vunpack.c.l.b16 %v475
    %v1206 = vunpack.c.h.b16 %v475
    %v1207 = vunpack.c.l.b16 %v476
    %v1208 = vunpack.c.h.b16 %v476
    %v1209 = vunpack.c.l.b16 %v477
    %v1210 = vunpack.c.h.b16 %v477
    %v1211 = vunpack.c.l.b16 %v478
    %v1212 = vunpack.c.h.b16 %v478
    %v1213 = vunpack.c.l.b16 %v479
    %v1214 = vunpack.c.h.b16 %v479
    %v1215 = vunpack.c.l.b16 %v480
    %v1216 = vunpack.c.h.b16 %v480
    %v1217 = vunpack.c.l.b16 %v481
    %v1218 = vunpack.c.h.b16 %v481
    %v1219 = vunpack.c.l.b16 %v482
    %v1220 = vunpack.c.h.b16 %v482
    %v1221 = vunpack.c.l.b16 %v483
    %v1222 = vunpack.c.h.b16 %v483
    %v1223 = vunpack.c.l.b16 %v484
    %v1224 = vunpack.c.h.b16 %v484
    %v1225 = vunpack.c.l.b16 %v485
    %v1226 = vunpack.c.h.b16 %v485
    %v1227 = vunpack.c.l.b16 %v486
    %v1228 = vunpack.c.h.b16 %v486
    %v1229 = vunpack.c.l.b16 %v487
    %v1230 = vunpack.c.h.b16 %v487
    %v1231 = vunpack.c.l.b16 %v488
    %v1232 = vunpack.c.h.b16 %v488
    %v1233 = vunpack.c.l.b16 %v489
    %v1234 = vunpack.c.h.b16 %v489
    %v1235 = vunpack.c.l.b16 %v490
    %v1236 = vunpack.c.h.b16 %v490
    %v1237 = vunpack.c.l.b16 %v491
    %v1238 = vunpack.c.h.b16 %v491
    %v1239 = vunpack.c.l.b16 %v492
    %v1240 = vunpack.c.h.b16 %v492
    %v1241 = vunpack.c.l.b16 %v493
    %v1242 = vunpack.c.h.b16 %v493
    %v1243 = vunpack.c.l.b16 %v494
    %v1244 = vunpack.c.h.b16 %v494
    %v1245 = vunpack.c.l.b16 %v495
    %v1246 = vunpack.c.h.b16 %v495
    %v1247 = vunpack.c.l.b16 %v496
    %v1248 = vunpack.c.h.b16 %v496
    %v1249 = vunpack.c.l.b16 %v497
    %v1250 = vunpack.c.h.b16 %v497
    %v1251 = vunpack.c.l.b16 %v498
    %v1252 = vunpack.c.h.b16 %v498
    %v1253 = vunpack.c.l.b16 %v499
    %v1254 = vunpack.c.h.b16 %v499
    %v1255 = vunpack.c.l.b16 %v500
    %v1256 = vunpack.c.h.b16 %v500
    %v1257 = vunpack.c.l.b16 %v501
    %v1258 = vunpack.c.h.b16 %v501
    %v1259 = vunpack.c.l.b16 %v502
    %v1260 = vunpack.c.h.b16 %v502
    %v1261 = vunpack.c.l.b16 %v503
    %v1262 = vunpack.c.h.b16 %v503
    %v1263 = vunpack.c.l.b16 %v504
    %v1264 = vunpack.c.h.b16 %v504
    %v1265 = vunpack.c.l.b16 %v505
    %v1266 = vunpack.c.h.b16 %v505
    %v1267 = vunpack.c.l.b16 %v506
    %v1268 = vunpack.c.h.b16 %v506
    %v1269 = vunpack.c.l.b16 %v507
    %v1270 = vunpack.c.h.b16 %v507
    %v1271 = vunpack.c.l.b16 %v508
    %v1272 = vunpack.c.h.b16 %v508
    %v1273 = vunpack.c.l.b16 %v509
    %v1274 = vunpack.c.h.b16 %v509
    %v1275 = vunpack.c.l.b16 %v510
    %v1276 = vunpack.c.h.b16 %v510
    %v1277 = vunpack.c.l.b16 %v511
    %v1278 = vunpack.c.h.b16 %v511
    %v1279 = vunpack.c.l.b16 %v512
    %v1280 = vunpack.c.h.b16 %v512
    %v1281 = vunpack.c.l.b16 %v513
    %v1282 = vunpack.c.h.b16 %v513
    %v1283 = vunpack.c.l.b16 %v514
    %v1284 = vunpack.c.h.b16 %v514
    %v1285 = vunpack.c.l.b16 %v515
    %v1286 = vunpack.c.h.b16 %v515
    %v1287 = vunpack.c.l.b16 %v516
    %v1288 = vunpack.c.h.b16 %v516
    %v1289 = vunpack.c.l.b16 %v517
    %v1290 = vunpack.c.h.b16 %v517
    %v1291 = vunpack.c.l.b16 %v518
    %v1292 = vunpack.c.h.b16 %v518
    %v1293 = vunpack.c.l.b16 %v519
    %v1294 = vunpack.c.h.b16 %v519
    %v1295 = vunpack.c.l.b16 %v520
    %v1296 = vunpack.c.h.b16 %v520
    %v1297 = vunpack.c.l.b16 %v521
    %v1298 = vunpack.c.h.b16 %v521
    %v1299 = vunpack.c.l.b16 %v522
    %v1300 = vunpack.c.h.b16 %v522
    %v1301 = vpack.c.b16 %v793, %v789
    %v1302 = vpack.c.b16 %v794, %v790
    %v1303 = vpack.c.b16 %v795, %v791
    %v1304 = vpack.c.b16 %v796, %v792
    %v1305 = vpack.c.b16 %v801, %v797
    %v1306 = vpack.c.b16 %v802, %v798
    %v1307 = vpack.c.b16 %v803, %v799
    %v1308 = vpack.c.b16 %v804, %v800
    %v1309 = vpack.c.b16 %v809, %v805
    %v1310 = vpack.c.b16 %v810, %v806
    %v1311 = vpack.c.b16 %v811, %v807
    %v1312 = vpack.c.b16 %v812, %v808
    %v1313 = vpack.c.b16 %v817, %v813
    %v1314 = vpack.c.b16 %v818, %v814
    %v1315 = vpack.c.b16 %v819, %v815
    %v1316 = vpack.c.b16 %v820, %v816
    %v1317 = vpack.c.b16 %v825, %v821
    %v1318 = vpack.c.b16 %v826, %v822
    %v1319 = vpack.c.b16 %v827, %v823
    %v1320 = vpack.c.b16 %v828, %v824
    %v1321 = vpack.c.b16 %v833, %v829
    %v1322 = vpack.c.b16 %v834, %v830
    %v1323 = vpack.c.b16 %v835, %v831
    %v1324 = vpack.c.b16 %v836, %v832
    %v1325 = vpack.c.b16 %v841, %v837
    %v1326 = vpack.c.b16 %v842, %v838
    %v1327 = vpack.c.b16 %v843, %v839
    %v1328 = vpack.c.b16 %v844, %v840
    %v1329 = vpack.c.b16 %v849, %v845
    %v1330 = vpack.c.b16 %v850, %v846
    %v1331 = vpack.c.b16 %v851, %v847
    %v1332 = vpack.c.b16 %v852, %v848
    %v1333 = vpack.c.b16 %v857, %v853
    %v1334 = vpack.c.b16 %v858, %v854
    %v1335 = vpack.c.b16 %v859, %v855
    %v1336 = vpack.c.b16 %v860, %v856
    %v1337 = vpack.c.b16 %v865, %v861
    %v1338 = vpack.c.b16 %v866, %v862
    %v1339 = vpack.c.b16 %v867, %v863
    %v1340 = vpack.c.b16 %v868, %v864
    %v1341 = vpack.c.b16 %v873, %v869
    %v1342 = vpack.c.b16 %v874, %v870
    %v1343 = vpack.c.b16 %v875, %v871
    %v1344 = vpack.c.b16 %v876, %v872
    %v1345 = vpack.c.b16 %v881, %v877
    %v1346 = vpack.c.b16 %v882, %v878
    %v1347 = vpack.c.b16 %v883, %v879
    %v1348 = vpack.c.b16 %v884, %v880
    %v1349 = vpack.c.b16 %v889, %v885
    %v1350 = vpack.c.b16 %v890, %v886
    %v1351 = vpack.c.b16 %v891, %v887
    %v1352 = vpack.c.b16 %v892, %v888
    %v1353 = vpack.c.b16 %v897, %v893
    %v1354 = vpack.c.b16 %v898, %v894
    %v1355 = vpack.c.b16 %v899, %v895
    %v1356 = vpack.c.b16 %v900, %v896
    %v1357 = vpack.c.b16 %v905, %v901
    %v1358 = vpack.c.b16 %v906, %v902
    %v1359 = vpack.c.b16 %v907, %v903
    %v1360 = vpack.c.b16 %v908, %v904
    %v1361 = vpack.c.b16 %v913, %v909
    %v1362 = vpack.c.b16 %v914, %v910
    %v1363 = vpack.c.b16 %v915, %v911
    %v1364 = vpack.c.b16 %v916, %v912
    %v1365 = vpack.c.b16 %v921, %v917
    %v1366 = vpack.c.b16 %v922, %v918
    %v1367 = vpack.c.b16 %v923, %v919
    %v1368 = vpack.c.b16 %v924, %v920
    %v1369 = vpack.c.b16 %v929, %v925
    %v1370 = vpack.c.b16 %v930, %v926
    %v1371 = vpack.c.b16 %v931, %v927
    %v1372 = vpack.c.b16 %v932, %v928
    %v1373 = vpack.c.b16 %v937, %v933
    %v1374 = vpack.c.b16 %v938, %v934
    %v1375 = vpack.c.b16 %v939, %v935
    %v1376 = vpack.c.b16 %v940, %v936
    %v1377 = vpack.c.b16 %v945, %v941
    %v1378 = vpack.c.b16 %v946, %v942
    %v1379 = vpack.c.b16 %v947, %v943
    %v1380 = vpack.c.b16 %v948, %v944
    %v1381 = vpack.c.b16 %v953, %v949
    %v1382 = vpack.c.b16 %v954, %v950
    %v1383 = vpack.c.b16 %v955, %v951
    %v1384 = vpack.c.b16 %v956, %v952
    %v1385 = vpack.c.b16 %v961, %v957
    %v1386 = vpack.c.b16 %v962, %v958
    %v1387 = vpack.c.b16 %v963, %v959
    %v1388 = vpack.c.b16 %v964, %v960
    %v1389 = vpack.c.b16 %v969, %v965
    %v1390 = vpack.c.b16 %v970, %v966
    %v1391 = vpack.c.b16 %v971, %v967
    %v1392 = vpack.c.b16 %v972, %v968
    %v1393 = vpack.c.b16 %v977, %v973
    %v1394 = vpack.c.b16 %v978, %v974
    %v1395 = vpack.c.b16 %v979, %v975
    %v1396 = vpack.c.b16 %v980, %v976
    %v1397 = vpack.c.b16 %v985, %v981
    %v1398 = vpack.c.b16 %v986, %v982
    %v1399 = vpack.c.b16 %v987, %v983
    %v1400 = vpack.c.b16 %v988, %v984
    %v1401 = vpack.c.b16 %v993, %v989
    %v1402 = vpack.c.b16 %v994, %v990
    %v1403 = vpack.c.b16 %v995, %v991
    %v1404 = vpack.c.b16 %v996, %v992
    %v1405 = vpack.c.b16 %v1001, %v997
    %v1406 = vpack.c.b16 %v1002, %v998
    %v1407 = vpack.c.b16 %v1003, %v999
    %v1408 = vpack.c.b16 %v1004, %v1000
    %v1409 = vpack.c.b16 %v1009, %v1005
    %v1410 = vpack.c.b16 %v1010, %v1006
    %v1411 = vpack.c.b16 %v1011, %v1007
    %v1412 = vpack.c.b16 %v1012, %v1008
    %v1413 = vpack.c.b16 %v1017, %v1013
    %v1414 = vpack.c.b16 %v1018, %v1014
    %v1415 = vpack.c.b16 %v1019, %v1015
    %v1416 = vpack.c.b16 %v1020, %v1016
    %v1417 = vpack.c.b16 %v1025, %v1021
    %v1418 = vpack.c.b16 %v1026, %v1022
    %v1419 = vpack.c.b16 %v1027, %v1023
    %v1420 = vpack.c.b16 %v1028, %v1024
    %v1421 = vpack.c.b16 %v1033, %v1029
    %v1422 = vpack.c.b16 %v1034, %v1030
    %v1423 = vpack.c.b16 %v1035, %v1031
    %v1424 = vpack.c.b16 %v1036, %v1032
    %v1425 = vpack.c.b16 %v1041, %v1037
    %v1426 = vpack.c.b16 %v1042, %v1038
    %v1427 = vpack.c.b16 %v1043, %v1039
    %v1428 = vpack.c.b16 %v1044, %v1040
    %v1429 = vpack.c.b16 %v1049, %v1045
    %v1430 = vpack.c.b16 %v1050, %v1046
    %v1431 = vpack.c.b16 %v1051, %v1047
    %v1432 = vpack.c.b16 %v1052, %v1048
    %v1433 = vpack.c.b16 %v1057, %v1053
    %v1434 = vpack.c.b16 %v1058, %v1054
    %v1435 = vpack.c.b16 %v1059, %v1055
    %v1436 = vpack.c.b16 %v1060, %v1056
    %v1437 = vpack.c.b16 %v1065, %v1061
    %v1438 = vpack.c.b16 %v1066, %v1062
    %v1439 = vpack.c.b16 %v1067, %v1063
    %v1440 = vpack.c.b16 %v1068, %v1064
    %v1441 = vpack.c.b16 %v1073, %v1069
    %v1442 = vpack.c.b16 %v1074, %v1070
    %v1443 = vpack.c.b16 %v1075, %v1071
    %v1444 = vpack.c.b16 %v1076, %v1072
    %v1445 = vpack.c.b16 %v1081, %v1077
    %v1446 = vpack.c.b16 %v1082, %v1078
    %v1447 = vpack.c.b16 %v1083, %v1079
    %v1448 = vpack.c.b16 %v1084, %v1080
    %v1449 = vpack.c.b16 %v1089, %v1085
    %v1450 = vpack.c.b16 %v1090, %v1086
    %v1451 = vpack.c.b16 %v1091, %v1087
    %v1452 = vpack.c.b16 %v1092, %v1088
    %v1453 = vpack.c.b16 %v1097, %v1093
    %v1454 = vpack.c.b16 %v1098, %v1094
    %v1455 = vpack.c.b16 %v1099, %v1095
    %v1456 = vpack.c.b16 %v1100, %v1096
    %v1457 = vpack.c.b16 %v1105, %v1101
    %v1458 = vpack.c.b16 %v1106, %v1102
    %v1459 = vpack.c.b16 %v1107, %v1103
    %v1460 = vpack.c.b16 %v1108, %v1104
    %v1461 = vpack.c.b16 %v1113, %v1109
    %v1462 = vpack.c.b16 %v1114, %v1110
    %v1463 = vpack.c.b16 %v1115, %v1111
    %v1464 = vpack.c.b16 %v1116, %v1112
    %v1465 = vpack.c.b16 %v1121, %v1117
    %v1466 = vpack.c.b16 %v1122, %v1118
    %v1467 = vpack.c.b16 %v1123, %v1119
    %v1468 = vpack.c.b16 %v1124, %v1120
    %v1469 = vpack.c.b16 %v1129, %v1125
    %v1470 = vpack.c.b16 %v1130, %v1126
    %v1471 = vpack.c.b16 %v1131, %v1127
    %v1472 = vpack.c.b16 %v1132, %v1128
    %v1473 = vpack.c.b16 %v1137, %v1133
    %v1474 = vpack.c.b16 %v1138, %v1134
    %v1475 = vpack.c.b16 %v1139, %v1135
    %v1476 = vpack.c.b16 %v1140, %v1136
    %v1477 = vpack.c.b16 %v1145, %v1141
    %v1478 = vpack.c.b16 %v1146, %v1142
    %v1479 = vpack.c.b16 %v1147, %v1143
    %v1480 = vpack.c.b16 %v1148, %v1144
    %v1481 = vpack.c.b16 %v1153, %v1149
    %v1482 = vpack.c.b16 %v1154, %v1150
    %v1483 = vpack.c.b16 %v1155, %v1151
    %v1484 = vpack.c.b16 %v1156, %v1152
    %v1485 = vpack.c.b16 %v1161, %v1157
    %v1486 = vpack.c.b16 %v1162, %v1158
    %v1487 = vpack.c.b16 %v1163, %v1159
    %v1488 = vpack.c.b16 %v1164, %v1160
    %v1489 = vpack.c.b16 %v1169, %v1165
    %v1490 = vpack.c.b16 %v1170, %v1166
    %v1491 = vpack.c.b16 %v1171, %v1167
    %v1492 = vpack.c.b16 %v1172, %v1168
    %v1493 = vpack.c.b16 %v1177, %v1173
    %v1494 = vpack.c.b16 %v1178, %v1174
    %v1495 = vpack.c.b16 %v1179, %v1175
    %v1496 = vpack.c.b16 %v1180, %v1176
    %v1497 = vpack.c.b16 %v1185, %v1181
    %v1498 = vpack.c.b16 %v1186, %v1182
    %v1499 = vpack.c.b16 %v1187, %v1183
    %v1500 = vpack.c.b16 %v1188, %v1184
    %v1501 = vpack.c.b16 %v1193, %v1189
    %v1502 = vpack.c.b16 %v1194, %v1190
    %v1503 = vpack.c.b16 %v1195, %v1191
    %v1504 = vpack.c.b16 %v1196, %v1192
    %v1505 = vpack.c.b16 %v1201, %v1197
    %v1506 = vpack.c.b16 %v1202, %v1198
    %v1507 = vpack.c.b16 %v1203, %v1199
    %v1508 = vpack.c.b16 %v1204, %v1200
    %v1509 = vpack.c.b16 %v1209, %v1205
    %v1510 = vpack.c.b16 %v1210, %v1206
    %v1511 = vpack.c.b16 %v1211, %v1207
    %v1512 = vpack.c.b16 %v1212, %v1208
    %v1513 = vpack.c.b16 %v1217, %v1213
    %v1514 = vpack.c.b16 %v1218, %v1214
    %v1515 = vpack.c.b16 %v1219, %v1215
    %v1516 = vpack.c.b16 %v1220, %v1216
    %v1517 = vpack.c.b16 %v1225, %v1221
    %v1518 = vpack.c.b16 %v1226, %v1222
    %v1519 = vpack.c.b16 %v1227, %v1223
    %v1520 = vpack.c.b16 %v1228, %v1224
    %v1521 = vpack.c.b16 %v1233, %v1229
    %v1522 = vpack.c.b16 %v1234, %v1230
    %v1523 = vpack.c.b16 %v1235, %v1231
    %v1524 = vpack.c.b16 %v1236, %v1232
    %v1525 = vpack.c.b16 %v1241, %v1237
    %v1526 = vpack.c.b16 %v1242, %v1238
    %v1527 = vpack.c.b16 %v1243, %v1239
    %v1528 = vpack.c.b16 %v1244, %v1240
    %v1529 = vpack.c.b16 %v1249, %v1245
    %v1530 = vpack.c.b16 %v1250, %v1246
    %v1531 = vpack.c.b16 %v1251, %v1247
    %v1532 = vpack.c.b16 %v1252, %v1248
    %v1533 = vpack.c.b16 %v1257, %v1253
    %v1534 = vpack.c.b16 %v1258, %v1254
    %v1535 = vpack.c.b16 %v1259, %v1255
    %v1536 = vpack.c.b16 %v1260, %v1256
    %v1537 = vpack.c.b16 %v1265, %v1261
    %v1538 = vpack.c.b16 %v1266, %v1262
    %v1539 = vpack.c.b16 %v1267, %v1263
    %v1540 = vpack.c.b16 %v1268, %v1264
    %v1541 = vpack.c.b16 %v1273, %v1269
    %v1542 = vpack.c.b16 %v1274, %v1270
    %v1543 = vpack.c.b16 %v1275, %v1271
    %v1544 = vpack.c.b16 %v1276, %v1272
    %v1545 = vpack.c.b16 %v1281, %v1277
    %v1546 = vpack.c.b16 %v1282, %v1278
    %v1547 = vpack.c.b16 %v1283, %v1279
    %v1548 = vpack.c.b16 %v1284, %v1280
    %v1549 = vpack.c.b16 %v1289, %v1285
    %v1550 = vpack.c.b16 %v1290, %v1286
    %v1551 = vpack.c.b16 %v1291, %v1287
    %v1552 = vpack.c.b16 %v1292, %v1288
    %v1553 = vpack.c.b16 %v1297, %v1293
    %v1554 = vpack.c.b16 %v1298, %v1294
    %v1555 = vpack.c.b16 %v1299, %v1295
    %v1556 = vpack.c.b16 %v1300, %v1296
    %1813 = vmatpush.bf16.msra.mxu0 %v1329
    %1814 = vmatpush.bf16.msra.mxu0 %v1325
    %1815 = vmatpush.bf16.msra.mxu0 %v1321
    %1816 = vmatpush.bf16.msra.mxu0 %v1317
    %1817 = vmatpush.bf16.msra.mxu0 %v1313
    %1818 = vmatpush.bf16.msra.mxu0 %v1309
    %1819 = vmatpush.bf16.msra.mxu0 %v1305
    %1820 = vmatpush.bf16.msra.mxu0 %v1301
    %1821 = vmatmul.bf16.gmra.mxu0 %v259
    %v1822 = vpop.f32.mrf.mxu0
    %v1823 = vadd.f32 %v525, %v1822
    %v1824 = vpop.f32.mrf.mxu0
    %1825 = vdwg.mxu0
    %1826 = vmatpush.bf16.msra.mxu0 %v1361
    %1827 = vmatpush.bf16.msra.mxu0 %v1357
    %1828 = vmatpush.bf16.msra.mxu0 %v1353
    %1829 = vmatpush.bf16.msra.mxu0 %v1349
    %1830 = vmatpush.bf16.msra.mxu0 %v1345
    %1831 = vmatpush.bf16.msra.mxu0 %v1341
    %1832 = vmatpush.bf16.msra.mxu0 %v1337
    %1833 = vmatpush.bf16.msra.mxu0 %v1333
    %1834 = vmatmul.bf16.gmra.mxu0 %v260
    %v1835 = vpop.f32.mrf.mxu0
    %v1836 = vadd.f32 %v1823, %v1835
    %v1837 = vpop.f32.mrf.mxu0
    %1838 = vdwg.mxu0
    %1839 = vmatpush.bf16.msra.mxu0 %v1393
    %1840 = vmatpush.bf16.msra.mxu0 %v1389
    %1841 = vmatpush.bf16.msra.mxu0 %v1385
    %1842 = vmatpush.bf16.msra.mxu0 %v1381
    %1843 = vmatpush.bf16.msra.mxu0 %v1377
    %1844 = vmatpush.bf16.msra.mxu0 %v1373
    %1845 = vmatpush.bf16.msra.mxu0 %v1369
    %1846 = vmatpush.bf16.msra.mxu0 %v1365
    %1847 = vmatmul.bf16.gmra.mxu0 %v261
    %v1848 = vpop.f32.mrf.mxu0
    %v1849 = vadd.f32 %v1836, %v1848
    %v1850 = vpop.f32.mrf.mxu0
    %1851 = vdwg.mxu0
    %1852 = vmatpush.bf16.msra.mxu0 %v1425
    %1853 = vmatpush.bf16.msra.mxu0 %v1421
    %1854 = vmatpush.bf16.msra.mxu0 %v1417
    %1855 = vmatpush.bf16.msra.mxu0 %v1413
    %1856 = vmatpush.bf16.msra.mxu0 %v1409
    %1857 = vmatpush.bf16.msra.mxu0 %v1405
    %1858 = vmatpush.bf16.msra.mxu0 %v1401
    %1859 = vmatpush.bf16.msra.mxu0 %v1397
    %1860 = vmatmul.bf16.gmra.mxu0 %v262
    %v1861 = vpop.f32.mrf.mxu0
    %v1862 = vadd.f32 %v1849, %v1861
    %v1863 = vpop.f32.mrf.mxu0
    %1864 = vdwg.mxu0
    %1865 = vmatpush.bf16.msra.mxu0 %v1457
    %1866 = vmatpush.bf16.msra.mxu0 %v1453
    %1867 = vmatpush.bf16.msra.mxu0 %v1449
    %1868 = vmatpush.bf16.msra.mxu0 %v1445
    %1869 = vmatpush.bf16.msra.mxu0 %v1441
    %1870 = vmatpush.bf16.msra.mxu0 %v1437
    %1871 = vmatpush.bf16.msra.mxu0 %v1433
    %1872 = vmatpush.bf16.msra.mxu0 %v1429
    %1873 = vmatmul.bf16.gmra.mxu0 %v263
    %v1874 = vpop.f32.mrf.mxu0
    %v1875 = vadd.f32 %v1862, %v1874
    %v1876 = vpop.f32.mrf.mxu0
    %1877 = vdwg.mxu0
    %1878 = vmatpush.bf16.msra.mxu0 %v1489
    %1879 = vmatpush.bf16.msra.mxu0 %v1485
    %1880 = vmatpush.bf16.msra.mxu0 %v1481
    %1881 = vmatpush.bf16.msra.mxu0 %v1477
    %1882 = vmatpush.bf16.msra.mxu0 %v1473
    %1883 = vmatpush.bf16.msra.mxu0 %v1469
    %1884 = vmatpush.bf16.msra.mxu0 %v1465
    %1885 = vmatpush.bf16.msra.mxu0 %v1461
    %1886 = vmatmul.bf16.gmra.mxu0 %v264
    %v1887 = vpop.f32.mrf.mxu0
    %v1888 = vadd.f32 %v1875, %v1887
    %v1889 = vpop.f32.mrf.mxu0
    %1890 = vdwg.mxu0
    %1891 = vmatpush.bf16.msra.mxu0 %v1521
    %1892 = vmatpush.bf16.msra.mxu0 %v1517
    %1893 = vmatpush.bf16.msra.mxu0 %v1513
    %1894 = vmatpush.bf16.msra.mxu0 %v1509
    %1895 = vmatpush.bf16.msra.mxu0 %v1505
    %1896 = vmatpush.bf16.msra.mxu0 %v1501
    %1897 = vmatpush.bf16.msra.mxu0 %v1497
    %1898 = vmatpush.bf16.msra.mxu0 %v1493
    %1899 = vmatmul.bf16.gmra.mxu0 %v265
    %v1900 = vpop.f32.mrf.mxu0
    %v1901 = vadd.f32 %v1888, %v1900
    %v1902 = vpop.f32.mrf.mxu0
    %1903 = vdwg.mxu0
    %1904 = vmatpush.bf16.msra.mxu0 %v1553
    %1905 = vmatpush.bf16.msra.mxu0 %v1549
    %1906 = vmatpush.bf16.msra.mxu0 %v1545
    %1907 = vmatpush.bf16.msra.mxu0 %v1541
    %1908 = vmatpush.bf16.msra.mxu0 %v1537
    %1909 = vmatpush.bf16.msra.mxu0 %v1533
    %1910 = vmatpush.bf16.msra.mxu0 %v1529
    %1911 = vmatpush.bf16.msra.mxu0 %v1525
    %1912 = vmatmul.bf16.gmra.mxu0 %v266
    %v1913 = vpop.f32.mrf.mxu0
    %v1914 = vadd.f32 %v1901, %v1913
    %v1915 = vpop.f32.mrf.mxu0
    %1916 = vdwg.mxu0
    %1917 = vmatpush.bf16.msra.mxu0 %v1330
    %1918 = vmatpush.bf16.msra.mxu0 %v1326
    %1919 = vmatpush.bf16.msra.mxu0 %v1322
    %1920 = vmatpush.bf16.msra.mxu0 %v1318
    %1921 = vmatpush.bf16.msra.mxu0 %v1314
    %1922 = vmatpush.bf16.msra.mxu0 %v1310
    %1923 = vmatpush.bf16.msra.mxu0 %v1306
    %1924 = vmatpush.bf16.msra.mxu0 %v1302
    %1925 = vmatmul.bf16.gmra.mxu0 %v259
    %v1926 = vpop.f32.mrf.mxu0
    %v1927 = vadd.f32 %v526, %v1926
    %v1928 = vpop.f32.mrf.mxu0
    %1929 = vdwg.mxu0
    %1930 = vmatpush.bf16.msra.mxu0 %v1362
    %1931 = vmatpush.bf16.msra.mxu0 %v1358
    %1932 = vmatpush.bf16.msra.mxu0 %v1354
    %1933 = vmatpush.bf16.msra.mxu0 %v1350
    %1934 = vmatpush.bf16.msra.mxu0 %v1346
    %1935 = vmatpush.bf16.msra.mxu0 %v1342
    %1936 = vmatpush.bf16.msra.mxu0 %v1338
    %1937 = vmatpush.bf16.msra.mxu0 %v1334
    %1938 = vmatmul.bf16.gmra.mxu0 %v260
    %v1939 = vpop.f32.mrf.mxu0
    %v1940 = vadd.f32 %v1927, %v1939
    %v1941 = vpop.f32.mrf.mxu0
    %1942 = vdwg.mxu0
    %1943 = vmatpush.bf16.msra.mxu0 %v1394
    %1944 = vmatpush.bf16.msra.mxu0 %v1390
    %1945 = vmatpush.bf16.msra.mxu0 %v1386
    %1946 = vmatpush.bf16.msra.mxu0 %v1382
    %1947 = vmatpush.bf16.msra.mxu0 %v1378
    %1948 = vmatpush.bf16.msra.mxu0 %v1374
    %1949 = vmatpush.bf16.msra.mxu0 %v1370
    %1950 = vmatpush.bf16.msra.mxu0 %v1366
    %1951 = vmatmul.bf16.gmra.mxu0 %v261
    %v1952 = vpop.f32.mrf.mxu0
    %v1953 = vadd.f32 %v1940, %v1952
    %v1954 = vpop.f32.mrf.mxu0
    %1955 = vdwg.mxu0
    %1956 = vmatpush.bf16.msra.mxu0 %v1426
    %1957 = vmatpush.bf16.msra.mxu0 %v1422
    %1958 = vmatpush.bf16.msra.mxu0 %v1418
    %1959 = vmatpush.bf16.msra.mxu0 %v1414
    %1960 = vmatpush.bf16.msra.mxu0 %v1410
    %1961 = vmatpush.bf16.msra.mxu0 %v1406
    %1962 = vmatpush.bf16.msra.mxu0 %v1402
    %1963 = vmatpush.bf16.msra.mxu0 %v1398
    %1964 = vmatmul.bf16.gmra.mxu0 %v262
    %v1965 = vpop.f32.mrf.mxu0
    %v1966 = vadd.f32 %v1953, %v1965
    %v1967 = vpop.f32.mrf.mxu0
    %1968 = vdwg.mxu0
    %1969 = vmatpush.bf16.msra.mxu0 %v1458
    %1970 = vmatpush.bf16.msra.mxu0 %v1454
    %1971 = vmatpush.bf16.msra.mxu0 %v1450
    %1972 = vmatpush.bf16.msra.mxu0 %v1446
    %1973 = vmatpush.bf16.msra.mxu0 %v1442
    %1974 = vmatpush.bf16.msra.mxu0 %v1438
    %1975 = vmatpush.bf16.msra.mxu0 %v1434
    %1976 = vmatpush.bf16.msra.mxu0 %v1430
    %1977 = vmatmul.bf16.gmra.mxu0 %v263
    %v1978 = vpop.f32.mrf.mxu0
    %v1979 = vadd.f32 %v1966, %v1978
    %v1980 = vpop.f32.mrf.mxu0
    %1981 = vdwg.mxu0
    %1982 = vmatpush.bf16.msra.mxu0 %v1490
    %1983 = vmatpush.bf16.msra.mxu0 %v1486
    %1984 = vmatpush.bf16.msra.mxu0 %v1482
    %1985 = vmatpush.bf16.msra.mxu0 %v1478
    %1986 = vmatpush.bf16.msra.mxu0 %v1474
    %1987 = vmatpush.bf16.msra.mxu0 %v1470
    %1988 = vmatpush.bf16.msra.mxu0 %v1466
    %1989 = vmatpush.bf16.msra.mxu0 %v1462
    %1990 = vmatmul.bf16.gmra.mxu0 %v264
    %v1991 = vpop.f32.mrf.mxu0
    %v1992 = vadd.f32 %v1979, %v1991
    %v1993 = vpop.f32.mrf.mxu0
    %1994 = vdwg.mxu0
    %1995 = vmatpush.bf16.msra.mxu0 %v1522
    %1996 = vmatpush.bf16.msra.mxu0 %v1518
    %1997 = vmatpush.bf16.msra.mxu0 %v1514
    %1998 = vmatpush.bf16.msra.mxu0 %v1510
    %1999 = vmatpush.bf16.msra.mxu0 %v1506
    %2000 = vmatpush.bf16.msra.mxu0 %v1502
    %2001 = vmatpush.bf16.msra.mxu0 %v1498
    %2002 = vmatpush.bf16.msra.mxu0 %v1494
    %2003 = vmatmul.bf16.gmra.mxu0 %v265
    %v2004 = vpop.f32.mrf.mxu0
    %v2005 = vadd.f32 %v1992, %v2004
    %v2006 = vpop.f32.mrf.mxu0
    %2007 = vdwg.mxu0
    %2008 = vmatpush.bf16.msra.mxu0 %v1554
    %2009 = vmatpush.bf16.msra.mxu0 %v1550
    %2010 = vmatpush.bf16.msra.mxu0 %v1546
    %2011 = vmatpush.bf16.msra.mxu0 %v1542
    %2012 = vmatpush.bf16.msra.mxu0 %v1538
    %2013 = vmatpush.bf16.msra.mxu0 %v1534
    %2014 = vmatpush.bf16.msra.mxu0 %v1530
    %2015 = vmatpush.bf16.msra.mxu0 %v1526
    %2016 = vmatmul.bf16.gmra.mxu0 %v266
    %v2017 = vpop.f32.mrf.mxu0
    %v2018 = vadd.f32 %v2005, %v2017
    %v2019 = vpop.f32.mrf.mxu0
    %2020 = vdwg.mxu0
    %2021 = vmatpush.bf16.msra.mxu0 %v1331
    %2022 = vmatpush.bf16.msra.mxu0 %v1327
    %2023 = vmatpush.bf16.msra.mxu0 %v1323
    %2024 = vmatpush.bf16.msra.mxu0 %v1319
    %2025 = vmatpush.bf16.msra.mxu0 %v1315
    %2026 = vmatpush.bf16.msra.mxu0 %v1311
    %2027 = vmatpush.bf16.msra.mxu0 %v1307
    %2028 = vmatpush.bf16.msra.mxu0 %v1303
    %2029 = vmatmul.bf16.gmra.mxu0 %v259
    %v2030 = vpop.f32.mrf.mxu0
    %v2031 = vadd.f32 %v527, %v2030
    %v2032 = vpop.f32.mrf.mxu0
    %2033 = vdwg.mxu0
    %2034 = vmatpush.bf16.msra.mxu0 %v1363
    %2035 = vmatpush.bf16.msra.mxu0 %v1359
    %2036 = vmatpush.bf16.msra.mxu0 %v1355
    %2037 = vmatpush.bf16.msra.mxu0 %v1351
    %2038 = vmatpush.bf16.msra.mxu0 %v1347
    %2039 = vmatpush.bf16.msra.mxu0 %v1343
    %2040 = vmatpush.bf16.msra.mxu0 %v1339
    %2041 = vmatpush.bf16.msra.mxu0 %v1335
    %2042 = vmatmul.bf16.gmra.mxu0 %v260
    %v2043 = vpop.f32.mrf.mxu0
    %v2044 = vadd.f32 %v2031, %v2043
    %v2045 = vpop.f32.mrf.mxu0
    %2046 = vdwg.mxu0
    %2047 = vmatpush.bf16.msra.mxu0 %v1395
    %2048 = vmatpush.bf16.msra.mxu0 %v1391
    %2049 = vmatpush.bf16.msra.mxu0 %v1387
    %2050 = vmatpush.bf16.msra.mxu0 %v1383
    %2051 = vmatpush.bf16.msra.mxu0 %v1379
    %2052 = vmatpush.bf16.msra.mxu0 %v1375
    %2053 = vmatpush.bf16.msra.mxu0 %v1371
    %2054 = vmatpush.bf16.msra.mxu0 %v1367
    %2055 = vmatmul.bf16.gmra.mxu0 %v261
    %v2056 = vpop.f32.mrf.mxu0
    %v2057 = vadd.f32 %v2044, %v2056
    %v2058 = vpop.f32.mrf.mxu0
    %2059 = vdwg.mxu0
    %2060 = vmatpush.bf16.msra.mxu0 %v1427
    %2061 = vmatpush.bf16.msra.mxu0 %v1423
    %2062 = vmatpush.bf16.msra.mxu0 %v1419
    %2063 = vmatpush.bf16.msra.mxu0 %v1415
    %2064 = vmatpush.bf16.msra.mxu0 %v1411
    %2065 = vmatpush.bf16.msra.mxu0 %v1407
    %2066 = vmatpush.bf16.msra.mxu0 %v1403
    %2067 = vmatpush.bf16.msra.mxu0 %v1399
    %2068 = vmatmul.bf16.gmra.mxu0 %v262
    %v2069 = vpop.f32.mrf.mxu0
    %v2070 = vadd.f32 %v2057, %v2069
    %v2071 = vpop.f32.mrf.mxu0
    %2072 = vdwg.mxu0
    %2073 = vmatpush.bf16.msra.mxu0 %v1459
    %2074 = vmatpush.bf16.msra.mxu0 %v1455
    %2075 = vmatpush.bf16.msra.mxu0 %v1451
    %2076 = vmatpush.bf16.msra.mxu0 %v1447
    %2077 = vmatpush.bf16.msra.mxu0 %v1443
    %2078 = vmatpush.bf16.msra.mxu0 %v1439
    %2079 = vmatpush.bf16.msra.mxu0 %v1435
    %2080 = vmatpush.bf16.msra.mxu0 %v1431
    %2081 = vmatmul.bf16.gmra.mxu0 %v263
    %v2082 = vpop.f32.mrf.mxu0
    %v2083 = vadd.f32 %v2070, %v2082
    %v2084 = vpop.f32.mrf.mxu0
    %2085 = vdwg.mxu0
    %2086 = vmatpush.bf16.msra.mxu0 %v1491
    %2087 = vmatpush.bf16.msra.mxu0 %v1487
    %2088 = vmatpush.bf16.msra.mxu0 %v1483
    %2089 = vmatpush.bf16.msra.mxu0 %v1479
    %2090 = vmatpush.bf16.msra.mxu0 %v1475
    %2091 = vmatpush.bf16.msra.mxu0 %v1471
    %2092 = vmatpush.bf16.msra.mxu0 %v1467
    %2093 = vmatpush.bf16.msra.mxu0 %v1463
    %2094 = vmatmul.bf16.gmra.mxu0 %v264
    %v2095 = vpop.f32.mrf.mxu0
    %v2096 = vadd.f32 %v2083, %v2095
    %v2097 = vpop.f32.mrf.mxu0
    %2098 = vdwg.mxu0
    %2099 = vmatpush.bf16.msra.mxu0 %v1523
    %2100 = vmatpush.bf16.msra.mxu0 %v1519
    %2101 = vmatpush.bf16.msra.mxu0 %v1515
    %2102 = vmatpush.bf16.msra.mxu0 %v1511
    %2103 = vmatpush.bf16.msra.mxu0 %v1507
    %2104 = vmatpush.bf16.msra.mxu0 %v1503
    %2105 = vmatpush.bf16.msra.mxu0 %v1499
    %2106 = vmatpush.bf16.msra.mxu0 %v1495
    %2107 = vmatmul.bf16.gmra.mxu0 %v265
    %v2108 = vpop.f32.mrf.mxu0
    %v2109 = vadd.f32 %v2096, %v2108
    %v2110 = vpop.f32.mrf.mxu0
    %2111 = vdwg.mxu0
    %2112 = vmatpush.bf16.msra.mxu0 %v1555
    %2113 = vmatpush.bf16.msra.mxu0 %v1551
    %2114 = vmatpush.bf16.msra.mxu0 %v1547
    %2115 = vmatpush.bf16.msra.mxu0 %v1543
    %2116 = vmatpush.bf16.msra.mxu0 %v1539
    %2117 = vmatpush.bf16.msra.mxu0 %v1535
    %2118 = vmatpush.bf16.msra.mxu0 %v1531
    %2119 = vmatpush.bf16.msra.mxu0 %v1527
    %2120 = vmatmul.bf16.gmra.mxu0 %v266
    %v2121 = vpop.f32.mrf.mxu0
    %v2122 = vadd.f32 %v2109, %v2121
    %v2123 = vpop.f32.mrf.mxu0
    %2124 = vdwg.mxu0
    %2125 = vmatpush.bf16.msra.mxu0 %v1332
    %2126 = vmatpush.bf16.msra.mxu0 %v1328
    %2127 = vmatpush.bf16.msra.mxu0 %v1324
    %2128 = vmatpush.bf16.msra.mxu0 %v1320
    %2129 = vmatpush.bf16.msra.mxu0 %v1316
    %2130 = vmatpush.bf16.msra.mxu0 %v1312
    %2131 = vmatpush.bf16.msra.mxu0 %v1308
    %2132 = vmatpush.bf16.msra.mxu0 %v1304
    %2133 = vmatmul.bf16.gmra.mxu0 %v259
    %v2134 = vpop.f32.mrf.mxu0
    %v2135 = vadd.f32 %v528, %v2134
    %v2136 = vpop.f32.mrf.mxu0
    %2137 = vdwg.mxu0
    %2138 = vmatpush.bf16.msra.mxu0 %v1364
    %2139 = vmatpush.bf16.msra.mxu0 %v1360
    %2140 = vmatpush.bf16.msra.mxu0 %v1356
    %2141 = vmatpush.bf16.msra.mxu0 %v1352
    %2142 = vmatpush.bf16.msra.mxu0 %v1348
    %2143 = vmatpush.bf16.msra.mxu0 %v1344
    %2144 = vmatpush.bf16.msra.mxu0 %v1340
    %2145 = vmatpush.bf16.msra.mxu0 %v1336
    %2146 = vmatmul.bf16.gmra.mxu0 %v260
    %v2147 = vpop.f32.mrf.mxu0
    %v2148 = vadd.f32 %v2135, %v2147
    %v2149 = vpop.f32.mrf.mxu0
    %2150 = vdwg.mxu0
    %2151 = vmatpush.bf16.msra.mxu0 %v1396
    %2152 = vmatpush.bf16.msra.mxu0 %v1392
    %2153 = vmatpush.bf16.msra.mxu0 %v1388
    %2154 = vmatpush.bf16.msra.mxu0 %v1384
    %2155 = vmatpush.bf16.msra.mxu0 %v1380
    %2156 = vmatpush.bf16.msra.mxu0 %v1376
    %2157 = vmatpush.bf16.msra.mxu0 %v1372
    %2158 = vmatpush.bf16.msra.mxu0 %v1368
    %2159 = vmatmul.bf16.gmra.mxu0 %v261
    %v2160 = vpop.f32.mrf.mxu0
    %v2161 = vadd.f32 %v2148, %v2160
    %v2162 = vpop.f32.mrf.mxu0
    %2163 = vdwg.mxu0
    %2164 = vmatpush.bf16.msra.mxu0 %v1428
    %2165 = vmatpush.bf16.msra.mxu0 %v1424
    %2166 = vmatpush.bf16.msra.mxu0 %v1420
    %2167 = vmatpush.bf16.msra.mxu0 %v1416
    %2168 = vmatpush.bf16.msra.mxu0 %v1412
    %2169 = vmatpush.bf16.msra.mxu0 %v1408
    %2170 = vmatpush.bf16.msra.mxu0 %v1404
    %2171 = vmatpush.bf16.msra.mxu0 %v1400
    %2172 = vmatmul.bf16.gmra.mxu0 %v262
    %v2173 = vpop.f32.mrf.mxu0
    %v2174 = vadd.f32 %v2161, %v2173
    %v2175 = vpop.f32.mrf.mxu0
    %2176 = vdwg.mxu0
    %2177 = vmatpush.bf16.msra.mxu0 %v1460
    %2178 = vmatpush.bf16.msra.mxu0 %v1456
    %2179 = vmatpush.bf16.msra.mxu0 %v1452
    %2180 = vmatpush.bf16.msra.mxu0 %v1448
    %2181 = vmatpush.bf16.msra.mxu0 %v1444
    %2182 = vmatpush.bf16.msra.mxu0 %v1440
    %2183 = vmatpush.bf16.msra.mxu0 %v1436
    %2184 = vmatpush.bf16.msra.mxu0 %v1432
    %2185 = vmatmul.bf16.gmra.mxu0 %v263
    %v2186 = vpop.f32.mrf.mxu0
    %v2187 = vadd.f32 %v2174, %v2186
    %v2188 = vpop.f32.mrf.mxu0
    %2189 = vdwg.mxu0
    %2190 = vmatpush.bf16.msra.mxu0 %v1492
    %2191 = vmatpush.bf16.msra.mxu0 %v1488
    %2192 = vmatpush.bf16.msra.mxu0 %v1484
    %2193 = vmatpush.bf16.msra.mxu0 %v1480
    %2194 = vmatpush.bf16.msra.mxu0 %v1476
    %2195 = vmatpush.bf16.msra.mxu0 %v1472
    %2196 = vmatpush.bf16.msra.mxu0 %v1468
    %2197 = vmatpush.bf16.msra.mxu0 %v1464
    %2198 = vmatmul.bf16.gmra.mxu0 %v264
    %v2199 = vpop.f32.mrf.mxu0
    %v2200 = vadd.f32 %v2187, %v2199
    %v2201 = vpop.f32.mrf.mxu0
    %2202 = vdwg.mxu0
    %2203 = vmatpush.bf16.msra.mxu0 %v1524
    %2204 = vmatpush.bf16.msra.mxu0 %v1520
    %2205 = vmatpush.bf16.msra.mxu0 %v1516
    %2206 = vmatpush.bf16.msra.mxu0 %v1512
    %2207 = vmatpush.bf16.msra.mxu0 %v1508
    %2208 = vmatpush.bf16.msra.mxu0 %v1504
    %2209 = vmatpush.bf16.msra.mxu0 %v1500
    %2210 = vmatpush.bf16.msra.mxu0 %v1496
    %2211 = vmatmul.bf16.gmra.mxu0 %v265
    %v2212 = vpop.f32.mrf.mxu0
    %v2213 = vadd.f32 %v2200, %v2212
    %v2214 = vpop.f32.mrf.mxu0
    %2215 = vdwg.mxu0
    %2216 = vmatpush.bf16.msra.mxu0 %v1556
    %2217 = vmatpush.bf16.msra.mxu0 %v1552
    %2218 = vmatpush.bf16.msra.mxu0 %v1548
    %2219 = vmatpush.bf16.msra.mxu0 %v1544
    %2220 = vmatpush.bf16.msra.mxu0 %v1540
    %2221 = vmatpush.bf16.msra.mxu0 %v1536
    %2222 = vmatpush.bf16.msra.mxu0 %v1532
    %2223 = vmatpush.bf16.msra.mxu0 %v1528
    %2224 = vmatmul.bf16.gmra.mxu0 %v266
    %v2225 = vpop.f32.mrf.mxu0
    %v2226 = vadd.f32 %v2213, %v2225
    %v2227 = vpop.f32.mrf.mxu0
    %2228 = vdwg.mxu0
    %v2229 = vmax.f32 %v1914, 0.0
    %v2230 = vmax.f32 %v2018, 0.0
    %v2231 = vmax.f32 %v2122, 0.0
    %v2232 = vmax.f32 %v2226, 0.0
    %v2233 = vpack.c.bf16 %v2229, %v2229
    %v2234 = vpack.c.bf16 %v2230, %v2230
    %v2235 = vpack.c.bf16 %v2231, %v2231
    %v2236 = vpack.c.bf16 %v2232, %v2232
    %v2237 = vld [vmem:[%s5] sm:$0xf]
    %v2238 = vld [vmem:[%s5 + $0x4] sm:$0xf]
    %v2239 = vld [vmem:[%s5 + $0x8] sm:$0xf]
    %v2240 = vld [vmem:[%s5 + $0xc] sm:$0xf]
    %v2241 = vld [vmem:[%s5 + $0x10] sm:$0xf]
    %v2242 = vld [vmem:[%s5 + $0x14] sm:$0xf]
    %v2243 = vld [vmem:[%s5 + $0x18] sm:$0xf]
    %v2244 = vld [vmem:[%s5 + $0x1c] sm:$0xf]
    %v2245 = vld [vmem:[%s5 + $0x20] sm:$0xf]
    %v2246 = vld [vmem:[%s5 + $0x24] sm:$0xf]
    %v2247 = vld [vmem:[%s5 + $0x28] sm:$0xf]
    %v2248 = vld [vmem:[%s5 + $0x2c] sm:$0xf]
    %v2249 = vld [vmem:[%s5 + $0x30] sm:$0xf]
    %v2250 = vld [vmem:[%s5 + $0x34] sm:$0xf]
    %v2251 = vld [vmem:[%s5 + $0x38] sm:$0xf]
    %v2252 = vld [vmem:[%s5 + $0x3c] sm:$0xf]
    %v2253 = vld [vmem:[%s5 + $0x40] sm:$0xf]
    %v2254 = vld [vmem:[%s5 + $0x44] sm:$0xf]
    %v2255 = vld [vmem:[%s5 + $0x48] sm:$0xf]
    %v2256 = vld [vmem:[%s5 + $0x4c] sm:$0xf]
    %v2257 = vld [vmem:[%s5 + $0x50] sm:$0xf]
    %v2258 = vld [vmem:[%s5 + $0x54] sm:$0xf]
    %v2259 = vld [vmem:[%s5 + $0x58] sm:$0xf]
    %v2260 = vld [vmem:[%s5 + $0x5c] sm:$0xf]
    %v2261 = vld [vmem:[%s5 + $0x60] sm:$0xf]
    %v2262 = vld [vmem:[%s5 + $0x64] sm:$0xf]
    %v2263 = vld [vmem:[%s5 + $0x68] sm:$0xf]
    %v2264 = vld [vmem:[%s5 + $0x6c] sm:$0xf]
    %v2265 = vld [vmem:[%s5 + $0x70] sm:$0xf]
    %v2266 = vld [vmem:[%s5 + $0x74] sm:$0xf]
    %v2267 = vld [vmem:[%s5 + $0x78] sm:$0xf]
    %v2268 = vld [vmem:[%s5 + $0x7c] sm:$0xf]
    %v2269 = vld [vmem:[%s5 + $0x80] sm:$0xf]
    %v2270 = vld [vmem:[%s5 + $0x84] sm:$0xf]
    %v2271 = vld [vmem:[%s5 + $0x88] sm:$0xf]
    %v2272 = vld [vmem:[%s5 + $0x8c] sm:$0xf]
    %v2273 = vld [vmem:[%s5 + $0x90] sm:$0xf]
    %v2274 = vld [vmem:[%s5 + $0x94] sm:$0xf]
    %v2275 = vld [vmem:[%s5 + $0x98] sm:$0xf]
    %v2276 = vld [vmem:[%s5 + $0x9c] sm:$0xf]
    %v2277 = vld [vmem:[%s5 + $0xa0] sm:$0xf]
    %v2278 = vld [vmem:[%s5 + $0xa4] sm:$0xf]
    %v2279 = vld [vmem:[%s5 + $0xa8] sm:$0xf]
    %v2280 = vld [vmem:[%s5 + $0xac] sm:$0xf]
    %v2281 = vld [vmem:[%s5 + $0xb0] sm:$0xf]
    %v2282 = vld [vmem:[%s5 + $0xb4] sm:$0xf]
    %v2283 = vld [vmem:[%s5 + $0xb8] sm:$0xf]
    %v2284 = vld [vmem:[%s5 + $0xbc] sm:$0xf]
    %v2285 = vld [vmem:[%s5 + $0xc0] sm:$0xf]
    %v2286 = vld [vmem:[%s5 + $0xc4] sm:$0xf]
    %v2287 = vld [vmem:[%s5 + $0xc8] sm:$0xf]
    %v2288 = vld [vmem:[%s5 + $0xcc] sm:$0xf]
    %v2289 = vld [vmem:[%s5 + $0xd0] sm:$0xf]
    %v2290 = vld [vmem:[%s5 + $0xd4] sm:$0xf]
    %v2291 = vld [vmem:[%s5 + $0xd8] sm:$0xf]
    %v2292 = vld [vmem:[%s5 + $0xdc] sm:$0xf]
    %v2293 = vld [vmem:[%s5 + $0xe0] sm:$0xf]
    %v2294 = vld [vmem:[%s5 + $0xe4] sm:$0xf]
    %v2295 = vld [vmem:[%s5 + $0xe8] sm:$0xf]
    %v2296 = vld [vmem:[%s5 + $0xec] sm:$0xf]
    %v2297 = vld [vmem:[%s5 + $0xf0] sm:$0xf]
    %v2298 = vld [vmem:[%s5 + $0xf4] sm:$0xf]
    %v2299 = vld [vmem:[%s5 + $0xf8] sm:$0xf]
    %v2300 = vld [vmem:[%s5 + $0xfc] sm:$0xf]
    %v2301 = vld [vmem:[%s6] sm:$0x1]
    %v2303 = vperm.slane %v2301, 0
    %v2369 = vunpack.c.l.b16 %v2237
    %v2370 = vunpack.c.l.b16 %v2238
    %v2371 = vunpack.c.l.b16 %v2239
    %v2372 = vunpack.c.l.b16 %v2240
    %v2373 = vunpack.c.l.b16 %v2241
    %v2374 = vunpack.c.l.b16 %v2242
    %v2375 = vunpack.c.l.b16 %v2243
    %v2376 = vunpack.c.l.b16 %v2244
    %v2377 = vunpack.c.l.b16 %v2245
    %v2378 = vunpack.c.l.b16 %v2246
    %v2379 = vunpack.c.l.b16 %v2247
    %v2380 = vunpack.c.l.b16 %v2248
    %v2381 = vunpack.c.l.b16 %v2249
    %v2382 = vunpack.c.l.b16 %v2250
    %v2383 = vunpack.c.l.b16 %v2251
    %v2384 = vunpack.c.l.b16 %v2252
    %v2385 = vunpack.c.l.b16 %v2253
    %v2386 = vunpack.c.l.b16 %v2254
    %v2387 = vunpack.c.l.b16 %v2255
    %v2388 = vunpack.c.l.b16 %v2256
    %v2389 = vunpack.c.l.b16 %v2257
    %v2390 = vunpack.c.l.b16 %v2258
    %v2391 = vunpack.c.l.b16 %v2259
    %v2392 = vunpack.c.l.b16 %v2260
    %v2393 = vunpack.c.l.b16 %v2261
    %v2394 = vunpack.c.l.b16 %v2262
    %v2395 = vunpack.c.l.b16 %v2263
    %v2396 = vunpack.c.l.b16 %v2264
    %v2397 = vunpack.c.l.b16 %v2265
    %v2398 = vunpack.c.l.b16 %v2266
    %v2399 = vunpack.c.l.b16 %v2267
    %v2400 = vunpack.c.l.b16 %v2268
    %v2401 = vunpack.c.l.b16 %v2269
    %v2402 = vunpack.c.l.b16 %v2270
    %v2403 = vunpack.c.l.b16 %v2271
    %v2404 = vunpack.c.l.b16 %v2272
    %v2405 = vunpack.c.l.b16 %v2273
    %v2406 = vunpack.c.l.b16 %v2274
    %v2407 = vunpack.c.l.b16 %v2275
    %v2408 = vunpack.c.l.b16 %v2276
    %v2409 = vunpack.c.l.b16 %v2277
    %v2410 = vunpack.c.l.b16 %v2278
    %v2411 = vunpack.c.l.b16 %v2279
    %v2412 = vunpack.c.l.b16 %v2280
    %v2413 = vunpack.c.l.b16 %v2281
    %v2414 = vunpack.c.l.b16 %v2282
    %v2415 = vunpack.c.l.b16 %v2283
    %v2416 = vunpack.c.l.b16 %v2284
    %v2417 = vunpack.c.l.b16 %v2285
    %v2418 = vunpack.c.l.b16 %v2286
    %v2419 = vunpack.c.l.b16 %v2287
    %v2420 = vunpack.c.l.b16 %v2288
    %v2421 = vunpack.c.l.b16 %v2289
    %v2422 = vunpack.c.l.b16 %v2290
    %v2423 = vunpack.c.l.b16 %v2291
    %v2424 = vunpack.c.l.b16 %v2292
    %v2425 = vunpack.c.l.b16 %v2293
    %v2426 = vunpack.c.l.b16 %v2294
    %v2427 = vunpack.c.l.b16 %v2295
    %v2428 = vunpack.c.l.b16 %v2296
    %v2429 = vunpack.c.l.b16 %v2297
    %v2430 = vunpack.c.l.b16 %v2298
    %v2431 = vunpack.c.l.b16 %v2299
    %v2432 = vunpack.c.l.b16 %v2300
    %v2433 = vpack.c.b16 %v2370, %v2369
    %v2434 = vpack.c.b16 %v2372, %v2371
    %v2435 = vpack.c.b16 %v2374, %v2373
    %v2436 = vpack.c.b16 %v2376, %v2375
    %v2437 = vpack.c.b16 %v2378, %v2377
    %v2438 = vpack.c.b16 %v2380, %v2379
    %v2439 = vpack.c.b16 %v2382, %v2381
    %v2440 = vpack.c.b16 %v2384, %v2383
    %v2441 = vpack.c.b16 %v2386, %v2385
    %v2442 = vpack.c.b16 %v2388, %v2387
    %v2443 = vpack.c.b16 %v2390, %v2389
    %v2444 = vpack.c.b16 %v2392, %v2391
    %v2445 = vpack.c.b16 %v2394, %v2393
    %v2446 = vpack.c.b16 %v2396, %v2395
    %v2447 = vpack.c.b16 %v2398, %v2397
    %v2448 = vpack.c.b16 %v2400, %v2399
    %v2449 = vpack.c.b16 %v2402, %v2401
    %v2450 = vpack.c.b16 %v2404, %v2403
    %v2451 = vpack.c.b16 %v2406, %v2405
    %v2452 = vpack.c.b16 %v2408, %v2407
    %v2453 = vpack.c.b16 %v2410, %v2409
    %v2454 = vpack.c.b16 %v2412, %v2411
    %v2455 = vpack.c.b16 %v2414, %v2413
    %v2456 = vpack.c.b16 %v2416, %v2415
    %v2457 = vpack.c.b16 %v2418, %v2417
    %v2458 = vpack.c.b16 %v2420, %v2419
    %v2459 = vpack.c.b16 %v2422, %v2421
    %v2460 = vpack.c.b16 %v2424, %v2423
    %v2461 = vpack.c.b16 %v2426, %v2425
    %v2462 = vpack.c.b16 %v2428, %v2427
    %v2463 = vpack.c.b16 %v2430, %v2429
    %v2464 = vpack.c.b16 %v2432, %v2431
    %2497 = vmatpush.bf16.msra.mxu0 %v2440
    %2498 = vmatpush.bf16.msra.mxu0 %v2439
    %2499 = vmatpush.bf16.msra.mxu0 %v2438
    %2500 = vmatpush.bf16.msra.mxu0 %v2437
    %2501 = vmatpush.bf16.msra.mxu0 %v2436
    %2502 = vmatpush.bf16.msra.mxu0 %v2435
    %2503 = vmatpush.bf16.msra.mxu0 %v2434
    %2504 = vmatpush.bf16.msra.mxu0 %v2433
    %2505 = vmatmul.bf16.gmra.mxu0 %v2233
    %v2506 = vpop.f32.mrf.mxu0
    %v2507 = vadd.f32 %v2303, %v2506
    %v2508 = vpop.f32.mrf.mxu0
    %2509 = vdwg.mxu0
    %2510 = vmatpush.bf16.msra.mxu0 %v2448
    %2511 = vmatpush.bf16.msra.mxu0 %v2447
    %2512 = vmatpush.bf16.msra.mxu0 %v2446
    %2513 = vmatpush.bf16.msra.mxu0 %v2445
    %2514 = vmatpush.bf16.msra.mxu0 %v2444
    %2515 = vmatpush.bf16.msra.mxu0 %v2443
    %2516 = vmatpush.bf16.msra.mxu0 %v2442
    %2517 = vmatpush.bf16.msra.mxu0 %v2441
    %2518 = vmatmul.bf16.gmra.mxu0 %v2234
    %v2519 = vpop.f32.mrf.mxu0
    %v2520 = vadd.f32 %v2507, %v2519
    %v2521 = vpop.f32.mrf.mxu0
    %2522 = vdwg.mxu0
    %2523 = vmatpush.bf16.msra.mxu0 %v2456
    %2524 = vmatpush.bf16.msra.mxu0 %v2455
    %2525 = vmatpush.bf16.msra.mxu0 %v2454
    %2526 = vmatpush.bf16.msra.mxu0 %v2453
    %2527 = vmatpush.bf16.msra.mxu0 %v2452
    %2528 = vmatpush.bf16.msra.mxu0 %v2451
    %2529 = vmatpush.bf16.msra.mxu0 %v2450
    %2530 = vmatpush.bf16.msra.mxu0 %v2449
    %2531 = vmatmul.bf16.gmra.mxu0 %v2235
    %v2532 = vpop.f32.mrf.mxu0
    %v2533 = vadd.f32 %v2520, %v2532
    %v2534 = vpop.f32.mrf.mxu0
    %2535 = vdwg.mxu0
    %2536 = vmatpush.bf16.msra.mxu0 %v2464
    %2537 = vmatpush.bf16.msra.mxu0 %v2463
    %2538 = vmatpush.bf16.msra.mxu0 %v2462
    %2539 = vmatpush.bf16.msra.mxu0 %v2461
    %2540 = vmatpush.bf16.msra.mxu0 %v2460
    %2541 = vmatpush.bf16.msra.mxu0 %v2459
    %2542 = vmatpush.bf16.msra.mxu0 %v2458
    %2543 = vmatpush.bf16.msra.mxu0 %v2457
    %2544 = vmatmul.bf16.gmra.mxu0 %v2236
    %v2545 = vpop.f32.mrf.mxu0
    %v2546 = vadd.f32 %v2533, %v2545
    %v2547 = vpop.f32.mrf.mxu0
    %2548 = vdwg.mxu0
    %2549 = vst [vmem:[#allocation2] sm:$0xff] %v2546
    // Predicated region
    $region30: #{dqn_forward.1} parent=1 // pred_check
      _
    $region31: #{dqn_forward.1} parent=1 // pred_check_branch
      %2551 = sbr.rel (0) target = $region33
    $region32: #{dqn_forward.1} parent=1 // pred_region
      %2553 = vsyncadd [#allocation3], 0
      %s2555 = sshll.u32 [#allocation2], 4
      %s2556 = int_to_ptr.vmem [resolvable:$true] %s2555
      %s2557 = sshll.u32 %s7, 4
      %s2558 = int_to_ptr.hbm [resolvable:$true] %s2557
      %2560 = dma.vmem_to_hbm [thread:$0]  %s2556, 128, %s2558, [#allocation3]
    $region33: #{dqn_forward.1} parent=1 // pred_fallthru
      _
    // Predicated region
    $region34: #{dqn_forward.1} parent=1 // pred_check
      _
    $region35: #{dqn_forward.1} parent=1 // pred_check_branch
      %2562 = sbr.rel (0) target = $region37
    $region36: #{dqn_forward.1} parent=1 // pred_region
      %2564 = dma.done [#allocation3], 128
    $region37: #{dqn_forward.1} parent=1 // pred_fallthru
      _
    %2565 = vsyncpa [#allocation3], 1

</llo_original>
